<compile_context>
chip_gen: v7x
topology: tpu7x:2x2x1
jax: 0.10.0
libtpu: 0.0.40
codegen_flags: <defaults>
</compile_context>

<pallas_src>
import functools

import jax
import jax.numpy as jnp
from jax.experimental import pallas as pl
from jax.experimental.pallas import tpu as pltpu


def rotate_score_kernel(h_ref, t_ref, out_ref):
    # (Bp, 2D) @ (2D, tile_n) -> (Bp, tile_n); bf16 inputs, f32 MXU accumulation,
    # bf16 writeback (halves output HBM traffic).
    out_ref[...] = jnp.dot(
        h_ref[...], t_ref[...], preferred_element_type=jnp.float32
    ).astype(out_ref.dtype)


def _vmem_capacity_bytes():
    try:
        return int(pltpu.get_tpu_info().vmem_capacity_bytes)
    except Exception:
        return 64 * 1024 * 1024  # conservative fallback (v7x per-TC VMEM)


def choose_tile_n(n_entities, d, batch, *, table_itemsize=2, out_itemsize=2):
    """Largest power-of-two tile_n (<= 8192) such that the double-buffered
    table+output tiles fit comfortably in this generation's VMEM and, when the
    table is big enough, the grid has >= 4 steps (>= 2 per v7x TensorCore)."""
    budget = int(0.6 * _vmem_capacity_bytes())       # headroom under scoped VMEM
    bp = max(16, -(-batch // 16) * 16)                # B padded for bf16-out sublanes

    def step_bytes(tn):
        return (2 * (2 * d * tn * table_itemsize + bp * tn * out_itemsize)
                + bp * 2 * d * table_itemsize)

    tile_n = 512
    while (tile_n * 2 <= 8192
           and step_bytes(tile_n * 2) <= budget
           and pl.cdiv(n_entities, tile_n * 2) >= 4):
        tile_n *= 2
    return tile_n


def prepare_target_table(ent_real_tbl, ent_img_tbl, *, tile_n,
                         table_dtype=jnp.bfloat16):
    """Setup-time (amortized across calls) preparation of the scoring table:
    concat(t_re, t_im, -1).T, cast to bf16, zero-pad N to a multiple of tile_n,
    then re-layout tile-major so every grid step is one contiguous DMA.
    Returns shape (n_tiles, 2*D, tile_n)."""
    N, D = ent_real_tbl.shape
    tcat = jnp.concatenate([ent_real_tbl, ent_img_tbl], axis=-1).T  # (2D, N)
    tcat = tcat.astype(table_dtype)
    n_pad = pl.cdiv(N, tile_n) * tile_n
    if n_pad != N:
        tcat = jnp.pad(tcat, ((0, 0), (0, n_pad - N)))
    n_tiles = n_pad // tile_n
    return tcat.reshape(2 * D, n_tiles, tile_n).transpose(1, 0, 2)


@functools.partial(jax.jit, static_argnames=("out_dtype",))
def rotate_forward(e1, r, ent_real_tbl, ent_img_tbl, rel_tbl, tcat, *,
                   out_dtype=jnp.bfloat16):
    N, D = ent_real_tbl.shape
    B = e1.shape[0]
    n_tiles, two_d, tile_n = tcat.shape          # tile_n derived from the table
    if two_d != 2 * D:
        raise ValueError("tcat was built for a different embedding dim")
    n_pad = n_tiles * tile_n

    # --- tiny per-query rotation: plain JAX prologue (fused by XLA, O(B*D)) ---
    h_re = ent_real_tbl[e1]
    h_im = ent_img_tbl[e1]
    theta = rel_tbl[r]
    r_re = jnp.cos(theta)
    r_im = jnp.sin(theta)
    score_re = h_re * r_re - h_im * r_im
    score_im = h_re * r_im + h_im * r_re
    h = jnp.concatenate([score_re, score_im], axis=-1).astype(tcat.dtype)  # (B, 2D)

    # Pad B to a full sublane multiple -> unmasked stores, full MXU rows.
    out_itemsize = jnp.dtype(out_dtype).itemsize
    sub = 16 if out_itemsize == 2 else 8
    Bp = pl.cdiv(B, sub) * sub
    if Bp != B:
        h = jnp.pad(h, ((0, Bp - B), (0, 0)))

    itemsize = jnp.dtype(tcat.dtype).itemsize
    t_tile_bytes = two_d * tile_n * itemsize
    o_tile_bytes = Bp * tile_n * out_itemsize
    vmem_limit = min(
        _vmem_capacity_bytes(),
        max(32 * 1024 * 1024,
            2 * (t_tile_bytes + o_tile_bytes) + Bp * two_d * itemsize + (2 << 20)))

    cost = pl.CostEstimate(
        flops=2 * Bp * two_d * n_pad,
        transcendentals=0,
        bytes_accessed=(n_tiles * t_tile_bytes
                        + Bp * two_d * itemsize
                        + Bp * n_pad * out_itemsize))

    out = pl.pallas_call(
        rotate_score_kernel,
        out_shape=jax.ShapeDtypeStruct((Bp, n_pad), out_dtype),
        grid_spec=pltpu.PrefetchScalarGridSpec(
            num_scalar_prefetch=0,
            grid=(n_tiles,),
            in_specs=[
                # tiny rotated-query matrix, resident across all grid steps
                pl.BlockSpec((Bp, two_d), lambda j: (0, 0)),
                # tile-major table: one contiguous DMA per grid step
                pl.BlockSpec((None, two_d, tile_n), lambda j: (j, 0, 0)),
            ],
            out_specs=pl.BlockSpec((Bp, tile_n), lambda j: (0, j)),
        ),
        compiler_params=pltpu.CompilerParams(
            dimension_semantics=("parallel",),   # no cross-step state; megacore safe
            vmem_limit_bytes=vmem_limit,
        ),
        cost_estimate=cost,
    )(h, tcat)
    # Drop padded batch rows and padded entity columns.
    return out[:B, :N]


def rotate_reference(e1, r, ent_real_tbl, ent_img_tbl, rel_tbl):
    """Pure-JAX, full-precision mirror of the PyTorch forward."""
    h_re = ent_real_tbl[e1]
    h_im = ent_img_tbl[e1]
    theta = rel_tbl[r]
    r_re = jnp.cos(theta)
    r_im = jnp.sin(theta)
    score_re = h_re * r_re - h_im * r_im
    score_im = h_re * r_im + h_im * r_re
    score = (score_re[:, None, :] * ent_real_tbl[None, :, :]
             + score_im[:, None, :] * ent_img_tbl[None, :, :])
    return jnp.sum(score, axis=-1)


# TODO(synk): forward_fact (per-pair L2 scoring) is a separate elementwise path and
# is not implemented here; only the module's `forward` scoring is translated.

if __name__ == "__main__":
    key = jax.random.PRNGKey(0)
    # N not a tile multiple -> exercises padding; grid has several entity tiles.
    N_ENT, N_REL, D, B = 20000, 16, 32, 2
    k1, k2, k3, k4, k5 = jax.random.split(key, 5)

    ent_real_tbl = jax.random.normal(k1, (N_ENT, D), jnp.float32)
    ent_img_tbl = jax.random.normal(k2, (N_ENT, D), jnp.float32)
    rel_tbl = jax.random.normal(k3, (N_REL, D), jnp.float32)
    e1 = jax.random.randint(k4, (B,), 0, N_ENT)
    r = jax.random.randint(k5, (B,), 0, N_REL)

    # Setup-time table prep (amortized over many forward calls).
    tile_n = choose_tile_n(N_ENT, D, B)
    tcat = prepare_target_table(ent_real_tbl, ent_img_tbl, tile_n=tile_n)

    out = rotate_forward(e1, r, ent_real_tbl, ent_img_tbl, rel_tbl, tcat)
    out = jax.block_until_ready(out)

    ref = rotate_reference(e1, r, ent_real_tbl, ent_img_tbl, rel_tbl)
    assert out.shape == (B, N_ENT)
    # Tolerance scaled to score magnitude (bf16 inputs + bf16 output writeback).
    out_f32 = out.astype(jnp.float32)
    tol = 4e-2 * (1.0 + float(jnp.max(jnp.abs(ref))))
    err = float(jnp.max(jnp.abs(out_f32 - ref)))
    assert err < tol, f"mismatch vs reference: {err} >= {tol}"
    print("KERNEL_OK")
</pallas_src>

<mosaic_0001>
module attributes {stable_mosaic.version = 11 : i64} {
  func.func @rotate_score_kernel(%arg0: i32, %arg1: memref<16x64xbf16, #tpu.memory_space<vmem>>, %arg2: memref<1x64x4096xbf16, #tpu.memory_space<vmem>>, %arg3: memref<16x4096xbf16, #tpu.memory_space<vmem>>) attributes {dimension_semantics = [#tpu.dimension_semantics<parallel>], iteration_bounds = array<i64: 5>, scalar_prefetch = 0 : i64, scratch_operands = 0 : i64, tpu.core_type = #tpu.core_type<tc>, window_params = [{pipeline_mode = #tpu.pipeline_mode<synchronous>, transform_indices = @transform_0, window_bounds = array<i64: 16, 64>}, {transform_indices = @transform_1, window_bounds = array<i64: 1, 64, 4096>}, {transform_indices = @transform_2, window_bounds = array<i64: 16, 4096>}]} {
    %c0 = arith.constant 0 : index
    %c0_0 = arith.constant 0 : index
    %0 = vector.load %arg1[%c0, %c0_0] : memref<16x64xbf16, #tpu.memory_space<vmem>>, vector<16x64xbf16>
    %c0_1 = arith.constant 0 : index
    %c0_2 = arith.constant 0 : index
    %c0_3 = arith.constant 0 : index
    %1 = vector.load %arg2[%c0_1, %c0_2, %c0_3] : memref<1x64x4096xbf16, #tpu.memory_space<vmem>>, vector<1x64x4096xbf16>
    %2 = vector.shape_cast %1 : vector<1x64x4096xbf16> to vector<64x4096xbf16>
    %cst = arith.constant dense<0.000000e+00> : vector<16x4096xf32>
    %3 = tpu.matmul %0, %2, %cst {dimension_numbers = #tpu.dot_dimension_numbers<[1], [0], [0], [1], [0, 0, 1, 1], [], []>} : vector<16x64xbf16>, vector<64x4096xbf16>, vector<16x4096xf32> -> vector<16x4096xf32>
    %4 = arith.truncf %3 : vector<16x4096xf32> to vector<16x4096xbf16>
    %c0_4 = arith.constant 0 : index
    %c0_5 = arith.constant 0 : index
    %5 = vector.load %arg3[%c0_4, %c0_5] : memref<16x4096xbf16, #tpu.memory_space<vmem>>, vector<16x4096xbf16>
    tpu.vector_store %arg3[%c0_4, %c0_5], %4 {strides = array<i32>} : memref<16x4096xbf16, #tpu.memory_space<vmem>>, vector<16x4096xbf16>,
    return
  }
  func.func @transform_0(%arg0: i32) -> (i32, i32) {
    %c0_i32 = arith.constant 0 : i32
    %c0_i32_0 = arith.constant 0 : i32
    %c0_i32_1 = arith.constant 0 : i32
    return %c0_i32, %c0_i32_0 : i32, i32
  }
  func.func @transform_1(%arg0: i32) -> (i32, i32, i32) {
    %c0_i32 = arith.constant 0 : i32
    %c0_i32_0 = arith.constant 0 : i32
    %c0_i32_1 = arith.constant 0 : i32
    return %arg0, %c0_i32, %c0_i32_0 : i32, i32, i32
  }
  func.func @transform_2(%arg0: i32) -> (i32, i32) {
    %c0_i32 = arith.constant 0 : i32
    %c0_i32_0 = arith.constant 0 : i32
    return %c0_i32, %arg0 : i32, i32
  }
}

</mosaic_0001>

<llo_original>
// kernel: rotate_forward.1
$region0: #{rotate_forward.1}
  #allocation0 [shape = 'u32[]', space=smem, size = 0x4, offset = 0x4, fixed_abs, tag = 'smem constant byte address 0x4 - core index']
  #allocation1 [shape = 'u32[144,128]{1,0:T(1,128)}', space=vmem, size = 0x12000, scoped, tag = 'internal scratch']
  %s0 = inlined_call_operand.vmem [shape: bf16[16,64], index: 0, kind: input, shape index: {}]
  %s1 = inlined_call_operand.vmem [shape: bf16[5,64,4096], index: 1, kind: input, shape index: {}]
  %s2 = inlined_call_operand.vmem [shape: bf16[16,20480], index: 2, kind: output, shape index: {}]
  %s3 = sld [smem:[#allocation0]]
  $region60: #{rotate_forward.1} parent=0
    _
  %s5 = ssub.s32 1, %s3
  %s6 = scalar_select 0, %s5, %s3
  $region1: #{rotate_forward.1} parent=0
    #allocation2 [shape = 'u8[262144]{0}', space=vmem, size = 0x40000, scoped, tag = 'output window, operand 0']
    loop: start=0, step=1, limit=7
    $region2: #{rotate_forward.1} parent=1 // loop_pre_header
      _
    $region3: #{rotate_forward.1} parent=1 // loop_header
      %s8 = sphi 0, %s12
      %p9 = scmp.ge.s32.totalorder %s8, 7
      %s16 = sphi 0, %s16
      %s18 = sphi 0, %s16
      %s19 = sphi 0, %s18
      %s33 = sphi 0, %s19
      %s39 = sphi 0, %s41
      %s42 = sphi 0, %s39
      %s43 = sphi 0, %s42
      %s59 = sphi 0, %s43
      %s65 = sphi 0, %s67
      %s68 = sphi 0, %s65
      %s69 = sphi 0, %s68
      %s85 = sphi 0, %s69
    $region4: #{rotate_forward.1} parent=1 // loop_header_branch
      %11 = sbr.rel (%p9) target = $region8
    $region5: #{rotate_forward.1} parent=1 // loop_body
      %s13 = ssub.s32 %s8, 1
      %s14 = ssub.s32 %s8, 2
      %s15 = sadd.s32 %s8, 1
      %s17 = sadd.s32 %s16, 1
      %p20 = scmp.eq.s32.totalorder %s8, 4
      %p21 = scmp.ne.s32.totalorder %s16, %s18
      %p22 = scmp.eq.s32.totalorder %s8, 0
      %p23 = por %p21, %p22
      %p24 = scmp.ne.s32.totalorder %s16, %s18
      %p25 = scmp.eq.s32.totalorder %s13, 4
      %p26 = por %p24, %p25
      %p27 = scmp.ne.s32.totalorder %s18, %s19
      %p28 = scmp.eq.s32.totalorder %s13, 0
      %p29 = por %p27, %p28
      %p30 = scmp.ne.s32.totalorder %s18, %s19
      %p31 = scmp.eq.s32.totalorder %s14, 4
      %p32 = por %p30, %p31
      %p34 = scmp.ne.s32.totalorder %s19, %s33
      %p35 = scmp.eq.s32.totalorder %s14, 0
      %p36 = por %p34, %p35
      %s37 = ssub.s32 %s8, %s15
      %p38 = scmp.eq.s32.totalorder %s37, 0
      %s40 = sadd.s32 %s39, 1
      %s41 = scalar_select %p38, %s39, %s40
      %p44 = pneg %p38
      %p45 = scmp.eq.s32.totalorder %s8, 4
      %p46 = por %p44, %p45
      %p47 = scmp.ne.s32.totalorder %s39, %s42
      %p48 = scmp.eq.s32.totalorder %s8, 0
      %p49 = por %p47, %p48
      %p50 = scmp.ne.s32.totalorder %s39, %s42
      %p51 = scmp.eq.s32.totalorder %s13, 4
      %p52 = por %p50, %p51
      %p53 = scmp.ne.s32.totalorder %s42, %s43
      %p54 = scmp.eq.s32.totalorder %s13, 0
      %p55 = por %p53, %p54
      %p56 = scmp.ne.s32.totalorder %s42, %s43
      %p57 = scmp.eq.s32.totalorder %s14, 4
      %p58 = por %p56, %p57
      %p60 = scmp.ne.s32.totalorder %s43, %s59
      %p61 = scmp.eq.s32.totalorder %s14, 0
      %p62 = por %p60, %p61
      %s63 = ssub.s32 %s8, %s15
      %p64 = scmp.eq.s32.totalorder %s63, 0
      %s66 = sadd.s32 %s65, 1
      %s67 = scalar_select %p64, %s65, %s66
      %p70 = pneg %p64
      %p71 = scmp.eq.s32.totalorder %s8, 4
      %p72 = por %p70, %p71
      %p73 = scmp.ne.s32.totalorder %s65, %s68
      %p74 = scmp.eq.s32.totalorder %s8, 0
      %p75 = por %p73, %p74
      %p76 = scmp.ne.s32.totalorder %s65, %s68
      %p77 = scmp.eq.s32.totalorder %s13, 4
      %p78 = por %p76, %p77
      %p79 = scmp.ne.s32.totalorder %s68, %s69
      %p80 = scmp.eq.s32.totalorder %s13, 0
      %p81 = por %p79, %p80
      %p82 = scmp.ne.s32.totalorder %s68, %s69
      %p83 = scmp.eq.s32.totalorder %s14, 4
      %p84 = por %p82, %p83
      %p86 = scmp.ne.s32.totalorder %s69, %s85
      %p87 = scmp.eq.s32.totalorder %s14, 0
      %p88 = por %p86, %p87
      %p89 = scmp.le.s32.totalorder 1, %s8
      %p90 = scmp.lt.s32.totalorder %s8, 6
      %p91 = pnand %p89, %p90
      %p92 = pneg %p91
      // Predicated region
      $region9: #{rotate_forward.1} parent=5 // pred_check
        _
      $region10: #{rotate_forward.1} parent=5 // pred_check_branch
        %94 = sbr.rel (%p91) target = $region12
      $region11: #{rotate_forward.1} parent=5 // pred_region
        %s95 = ssub.s32 %s8, 1
        // Predicated region
        $region13: #{rotate_forward.1} parent=11 // pred_check
          %p96 = pneg %p29
        $region14: #{rotate_forward.1} parent=11 // pred_check_branch
          %98 = sbr.rel (%p96) target = $region16
        $region15: #{rotate_forward.1} parent=11 // pred_region
          _
        $region16: #{rotate_forward.1} parent=11 // pred_fallthru
          _
      $region12: #{rotate_forward.1} parent=5 // pred_fallthru
        _
      %p99 = scmp.lt.s32.totalorder %s8, 5
      // Predicated region
      $region17: #{rotate_forward.1} parent=5 // pred_check
        %p100 = pneg %p99
      $region18: #{rotate_forward.1} parent=5 // pred_check_branch
        %102 = sbr.rel (%p100) target = $region20
      $region19: #{rotate_forward.1} parent=5 // pred_region
        // Predicated region
        $region21: #{rotate_forward.1} parent=19 // pred_check
          %p103 = pneg %p49
        $region22: #{rotate_forward.1} parent=19 // pred_check_branch
          %105 = sbr.rel (%p103) target = $region24
        $region23: #{rotate_forward.1} parent=19 // pred_region
          %p106 = scmp.lt.s32.totalorder %s8, 4
          %s107 = scalar_select %p106, %s8, 4
          %s108 = smul.addr %s107, 256
          %s109 = smul.addr %s108, 4
          %s110 = scalar_lea.vmem %s1, %s109
        $region24: #{rotate_forward.1} parent=19 // pred_fallthru
          _
      $region20: #{rotate_forward.1} parent=5 // pred_fallthru
        _
      %p111 = scmp.le.s32.totalorder 1, %s8
      %p112 = scmp.lt.s32.totalorder %s8, 6
      %p113 = pnand %p111, %p112
      %p114 = pneg %p113
      // Predicated region
      $region25: #{rotate_forward.1} parent=5 // pred_check
        _
      $region26: #{rotate_forward.1} parent=5 // pred_check_branch
        %116 = sbr.rel (%p113) target = $region28
      $region27: #{rotate_forward.1} parent=5 // pred_region
        %s117 = ssub.s32 %s8, 1
        %p118 = pneg %p29
        %p119 = pneg %p26
        %p120 = scmp.lt.s32.totalorder %s13, 4
        %s121 = scalar_select %p120, %s13, 4
        %s122 = smul.addr %s121, 256
        %s123 = smul.addr %s122, 4
        %s124 = scalar_lea.vmem %s1, %s123
        %p125 = pneg %p55
        %p126 = pneg %p52
        %p127 = pneg %p81
        %p128 = pneg %p78
        %s129 = sand.u32 %s68, 1
        %s130 = sand.u32 %s68, 1
        %s131 = smul.addr %s130, 256
        %s132 = scalar_lea.vmem [#allocation2], %s131
        %p133 = scmp.lt.s32.totalorder %s13, 4
        %s134 = scalar_select %p133, %s13, 4
        %s135 = smul.addr %s134, 256
        %s136 = smul.addr %s135, 4
        %s137 = scalar_lea.vmem %s1, %s136
        %s138 = smul.u32 32, %s13
        %v140 = vld [vmem:[%s0] sm:$0xf]
        %v141 = vld [vmem:[%s0 + $0x4] sm:$0xf]
        %v142 = vld [vmem:[%s137] sm:$0xff]
        %v143 = vld [vmem:[%s137 + $0x8] sm:$0xff]
        %v144 = vld [vmem:[%s137 + $0x10] sm:$0xff]
        %v145 = vld [vmem:[%s137 + $0x18] sm:$0xff]
        %v146 = vld [vmem:[%s137 + $0x20] sm:$0xff]
        %v147 = vld [vmem:[%s137 + $0x28] sm:$0xff]
        %v148 = vld [vmem:[%s137 + $0x30] sm:$0xff]
        %v149 = vld [vmem:[%s137 + $0x38] sm:$0xff]
        %v150 = vld [vmem:[%s137 + $0x40] sm:$0xff]
        %v151 = vld [vmem:[%s137 + $0x48] sm:$0xff]
        %v152 = vld [vmem:[%s137 + $0x50] sm:$0xff]
        %v153 = vld [vmem:[%s137 + $0x58] sm:$0xff]
        %v154 = vld [vmem:[%s137 + $0x60] sm:$0xff]
        %v155 = vld [vmem:[%s137 + $0x68] sm:$0xff]
        %v156 = vld [vmem:[%s137 + $0x70] sm:$0xff]
        %v157 = vld [vmem:[%s137 + $0x78] sm:$0xff]
        %v158 = vld [vmem:[%s137 + $0x80] sm:$0xff]
        %v159 = vld [vmem:[%s137 + $0x88] sm:$0xff]
        %v160 = vld [vmem:[%s137 + $0x90] sm:$0xff]
        %v161 = vld [vmem:[%s137 + $0x98] sm:$0xff]
        %v162 = vld [vmem:[%s137 + $0xa0] sm:$0xff]
        %v163 = vld [vmem:[%s137 + $0xa8] sm:$0xff]
        %v164 = vld [vmem:[%s137 + $0xb0] sm:$0xff]
        %v165 = vld [vmem:[%s137 + $0xb8] sm:$0xff]
        %v166 = vld [vmem:[%s137 + $0xc0] sm:$0xff]
        %v167 = vld [vmem:[%s137 + $0xc8] sm:$0xff]
        %v168 = vld [vmem:[%s137 + $0xd0] sm:$0xff]
        %v169 = vld [vmem:[%s137 + $0xd8] sm:$0xff]
        %v170 = vld [vmem:[%s137 + $0xe0] sm:$0xff]
        %v171 = vld [vmem:[%s137 + $0xe8] sm:$0xff]
        %v172 = vld [vmem:[%s137 + $0xf0] sm:$0xff]
        %v173 = vld [vmem:[%s137 + $0xf8] sm:$0xff]
        %v174 = vld [vmem:[%s137 + $0x100] sm:$0xff]
        %v175 = vld [vmem:[%s137 + $0x108] sm:$0xff]
        %v176 = vld [vmem:[%s137 + $0x110] sm:$0xff]
        %v177 = vld [vmem:[%s137 + $0x118] sm:$0xff]
        %v178 = vld [vmem:[%s137 + $0x120] sm:$0xff]
        %v179 = vld [vmem:[%s137 + $0x128] sm:$0xff]
        %v180 = vld [vmem:[%s137 + $0x130] sm:$0xff]
        %v181 = vld [vmem:[%s137 + $0x138] sm:$0xff]
        %v182 = vld [vmem:[%s137 + $0x140] sm:$0xff]
        %v183 = vld [vmem:[%s137 + $0x148] sm:$0xff]
        %v184 = vld [vmem:[%s137 + $0x150] sm:$0xff]
        %v185 = vld [vmem:[%s137 + $0x158] sm:$0xff]
        %v186 = vld [vmem:[%s137 + $0x160] sm:$0xff]
        %v187 = vld [vmem:[%s137 + $0x168] sm:$0xff]
        %v188 = vld [vmem:[%s137 + $0x170] sm:$0xff]
        %v189 = vld [vmem:[%s137 + $0x178] sm:$0xff]
        %v190 = vld [vmem:[%s137 + $0x180] sm:$0xff]
        %v191 = vld [vmem:[%s137 + $0x188] sm:$0xff]
        %v192 = vld [vmem:[%s137 + $0x190] sm:$0xff]
        %v193 = vld [vmem:[%s137 + $0x198] sm:$0xff]
        %v194 = vld [vmem:[%s137 + $0x1a0] sm:$0xff]
        %v195 = vld [vmem:[%s137 + $0x1a8] sm:$0xff]
        %v196 = vld [vmem:[%s137 + $0x1b0] sm:$0xff]
        %v197 = vld [vmem:[%s137 + $0x1b8] sm:$0xff]
        %v198 = vld [vmem:[%s137 + $0x1c0] sm:$0xff]
        %v199 = vld [vmem:[%s137 + $0x1c8] sm:$0xff]
        %v200 = vld [vmem:[%s137 + $0x1d0] sm:$0xff]
        %v201 = vld [vmem:[%s137 + $0x1d8] sm:$0xff]
        %v202 = vld [vmem:[%s137 + $0x1e0] sm:$0xff]
        %v203 = vld [vmem:[%s137 + $0x1e8] sm:$0xff]
        %v204 = vld [vmem:[%s137 + $0x1f0] sm:$0xff]
        %v205 = vld [vmem:[%s137 + $0x1f8] sm:$0xff]
        %v206 = vld [vmem:[%s137 + $0x200] sm:$0xff]
        %v207 = vld [vmem:[%s137 + $0x208] sm:$0xff]
        %v208 = vld [vmem:[%s137 + $0x210] sm:$0xff]
        %v209 = vld [vmem:[%s137 + $0x218] sm:$0xff]
        %v210 = vld [vmem:[%s137 + $0x220] sm:$0xff]
        %v211 = vld [vmem:[%s137 + $0x228] sm:$0xff]
        %v212 = vld [vmem:[%s137 + $0x230] sm:$0xff]
        %v213 = vld [vmem:[%s137 + $0x238] sm:$0xff]
        %v214 = vld [vmem:[%s137 + $0x240] sm:$0xff]
        %v215 = vld [vmem:[%s137 + $0x248] sm:$0xff]
        %v216 = vld [vmem:[%s137 + $0x250] sm:$0xff]
        %v217 = vld [vmem:[%s137 + $0x258] sm:$0xff]
        %v218 = vld [vmem:[%s137 + $0x260] sm:$0xff]
        %v219 = vld [vmem:[%s137 + $0x268] sm:$0xff]
        %v220 = vld [vmem:[%s137 + $0x270] sm:$0xff]
        %v221 = vld [vmem:[%s137 + $0x278] sm:$0xff]
        %v222 = vld [vmem:[%s137 + $0x280] sm:$0xff]
        %v223 = vld [vmem:[%s137 + $0x288] sm:$0xff]
        %v224 = vld [vmem:[%s137 + $0x290] sm:$0xff]
        %v225 = vld [vmem:[%s137 + $0x298] sm:$0xff]
        %v226 = vld [vmem:[%s137 + $0x2a0] sm:$0xff]
        %v227 = vld [vmem:[%s137 + $0x2a8] sm:$0xff]
        %v228 = vld [vmem:[%s137 + $0x2b0] sm:$0xff]
        %v229 = vld [vmem:[%s137 + $0x2b8] sm:$0xff]
        %v230 = vld [vmem:[%s137 + $0x2c0] sm:$0xff]
        %v231 = vld [vmem:[%s137 + $0x2c8] sm:$0xff]
        %v232 = vld [vmem:[%s137 + $0x2d0] sm:$0xff]
        %v233 = vld [vmem:[%s137 + $0x2d8] sm:$0xff]
        %v234 = vld [vmem:[%s137 + $0x2e0] sm:$0xff]
        %v235 = vld [vmem:[%s137 + $0x2e8] sm:$0xff]
        %v236 = vld [vmem:[%s137 + $0x2f0] sm:$0xff]
        %v237 = vld [vmem:[%s137 + $0x2f8] sm:$0xff]
        %v238 = vld [vmem:[%s137 + $0x300] sm:$0xff]
        %v239 = vld [vmem:[%s137 + $0x308] sm:$0xff]
        %v240 = vld [vmem:[%s137 + $0x310] sm:$0xff]
        %v241 = vld [vmem:[%s137 + $0x318] sm:$0xff]
        %v242 = vld [vmem:[%s137 + $0x320] sm:$0xff]
        %v243 = vld [vmem:[%s137 + $0x328] sm:$0xff]
        %v244 = vld [vmem:[%s137 + $0x330] sm:$0xff]
        %v245 = vld [vmem:[%s137 + $0x338] sm:$0xff]
        %v246 = vld [vmem:[%s137 + $0x340] sm:$0xff]
        %v247 = vld [vmem:[%s137 + $0x348] sm:$0xff]
        %v248 = vld [vmem:[%s137 + $0x350] sm:$0xff]
        %v249 = vld [vmem:[%s137 + $0x358] sm:$0xff]
        %v250 = vld [vmem:[%s137 + $0x360] sm:$0xff]
        %v251 = vld [vmem:[%s137 + $0x368] sm:$0xff]
        %v252 = vld [vmem:[%s137 + $0x370] sm:$0xff]
        %v253 = vld [vmem:[%s137 + $0x378] sm:$0xff]
        %v254 = vld [vmem:[%s137 + $0x380] sm:$0xff]
        %v255 = vld [vmem:[%s137 + $0x388] sm:$0xff]
        %v256 = vld [vmem:[%s137 + $0x390] sm:$0xff]
        %v257 = vld [vmem:[%s137 + $0x398] sm:$0xff]
        %v258 = vld [vmem:[%s137 + $0x3a0] sm:$0xff]
        %v259 = vld [vmem:[%s137 + $0x3a8] sm:$0xff]
        %v260 = vld [vmem:[%s137 + $0x3b0] sm:$0xff]
        %v261 = vld [vmem:[%s137 + $0x3b8] sm:$0xff]
        %v262 = vld [vmem:[%s137 + $0x3c0] sm:$0xff]
        %v263 = vld [vmem:[%s137 + $0x3c8] sm:$0xff]
        %v264 = vld [vmem:[%s137 + $0x3d0] sm:$0xff]
        %v265 = vld [vmem:[%s137 + $0x3d8] sm:$0xff]
        %v266 = vld [vmem:[%s137 + $0x3e0] sm:$0xff]
        %v267 = vld [vmem:[%s137 + $0x3e8] sm:$0xff]
        %v268 = vld [vmem:[%s137 + $0x3f0] sm:$0xff]
        %v269 = vld [vmem:[%s137 + $0x3f8] sm:$0xff]
        %v272 = vunpack.c.l.b16 %v140
        %v273 = vunpack.c.l.b16 %v141
        %v274 = vpack.c.b16 %v273, %v272
        %v403 = vunpack.c.l.b16 %v142
        %v404 = vunpack.c.h.b16 %v142
        %v405 = vunpack.c.l.b16 %v143
        %v406 = vunpack.c.h.b16 %v143
        %v407 = vunpack.c.l.b16 %v144
        %v408 = vunpack.c.h.b16 %v144
        %v409 = vunpack.c.l.b16 %v145
        %v410 = vunpack.c.h.b16 %v145
        %v411 = vunpack.c.l.b16 %v146
        %v412 = vunpack.c.h.b16 %v146
        %v413 = vunpack.c.l.b16 %v147
        %v414 = vunpack.c.h.b16 %v147
        %v415 = vunpack.c.l.b16 %v148
        %v416 = vunpack.c.h.b16 %v148
        %v417 = vunpack.c.l.b16 %v149
        %v418 = vunpack.c.h.b16 %v149
        %v419 = vunpack.c.l.b16 %v150
        %v420 = vunpack.c.h.b16 %v150
        %v421 = vunpack.c.l.b16 %v151
        %v422 = vunpack.c.h.b16 %v151
        %v423 = vunpack.c.l.b16 %v152
        %v424 = vunpack.c.h.b16 %v152
        %v425 = vunpack.c.l.b16 %v153
        %v426 = vunpack.c.h.b16 %v153
        %v427 = vunpack.c.l.b16 %v154
        %v428 = vunpack.c.h.b16 %v154
        %v429 = vunpack.c.l.b16 %v155
        %v430 = vunpack.c.h.b16 %v155
        %v431 = vunpack.c.l.b16 %v156
        %v432 = vunpack.c.h.b16 %v156
        %v433 = vunpack.c.l.b16 %v157
        %v434 = vunpack.c.h.b16 %v157
        %v435 = vunpack.c.l.b16 %v158
        %v436 = vunpack.c.h.b16 %v158
        %v437 = vunpack.c.l.b16 %v159
        %v438 = vunpack.c.h.b16 %v159
        %v439 = vunpack.c.l.b16 %v160
        %v440 = vunpack.c.h.b16 %v160
        %v441 = vunpack.c.l.b16 %v161
        %v442 = vunpack.c.h.b16 %v161
        %v443 = vunpack.c.l.b16 %v162
        %v444 = vunpack.c.h.b16 %v162
        %v445 = vunpack.c.l.b16 %v163
        %v446 = vunpack.c.h.b16 %v163
        %v447 = vunpack.c.l.b16 %v164
        %v448 = vunpack.c.h.b16 %v164
        %v449 = vunpack.c.l.b16 %v165
        %v450 = vunpack.c.h.b16 %v165
        %v451 = vunpack.c.l.b16 %v166
        %v452 = vunpack.c.h.b16 %v166
        %v453 = vunpack.c.l.b16 %v167
        %v454 = vunpack.c.h.b16 %v167
        %v455 = vunpack.c.l.b16 %v168
        %v456 = vunpack.c.h.b16 %v168
        %v457 = vunpack.c.l.b16 %v169
        %v458 = vunpack.c.h.b16 %v169
        %v459 = vunpack.c.l.b16 %v170
        %v460 = vunpack.c.h.b16 %v170
        %v461 = vunpack.c.l.b16 %v171
        %v462 = vunpack.c.h.b16 %v171
        %v463 = vunpack.c.l.b16 %v172
        %v464 = vunpack.c.h.b16 %v172
        %v465 = vunpack.c.l.b16 %v173
        %v466 = vunpack.c.h.b16 %v173
        %v467 = vunpack.c.l.b16 %v174
        %v468 = vunpack.c.h.b16 %v174
        %v469 = vunpack.c.l.b16 %v175
        %v470 = vunpack.c.h.b16 %v175
        %v471 = vunpack.c.l.b16 %v176
        %v472 = vunpack.c.h.b16 %v176
        %v473 = vunpack.c.l.b16 %v177
        %v474 = vunpack.c.h.b16 %v177
        %v475 = vunpack.c.l.b16 %v178
        %v476 = vunpack.c.h.b16 %v178
        %v477 = vunpack.c.l.b16 %v179
        %v478 = vunpack.c.h.b16 %v179
        %v479 = vunpack.c.l.b16 %v180
        %v480 = vunpack.c.h.b16 %v180
        %v481 = vunpack.c.l.b16 %v181
        %v482 = vunpack.c.h.b16 %v181
        %v483 = vunpack.c.l.b16 %v182
        %v484 = vunpack.c.h.b16 %v182
        %v485 = vunpack.c.l.b16 %v183
        %v486 = vunpack.c.h.b16 %v183
        %v487 = vunpack.c.l.b16 %v184
        %v488 = vunpack.c.h.b16 %v184
        %v489 = vunpack.c.l.b16 %v185
        %v490 = vunpack.c.h.b16 %v185
        %v491 = vunpack.c.l.b16 %v186
        %v492 = vunpack.c.h.b16 %v186
        %v493 = vunpack.c.l.b16 %v187
        %v494 = vunpack.c.h.b16 %v187
        %v495 = vunpack.c.l.b16 %v188
        %v496 = vunpack.c.h.b16 %v188
        %v497 = vunpack.c.l.b16 %v189
        %v498 = vunpack.c.h.b16 %v189
        %v499 = vunpack.c.l.b16 %v190
        %v500 = vunpack.c.h.b16 %v190
        %v501 = vunpack.c.l.b16 %v191
        %v502 = vunpack.c.h.b16 %v191
        %v503 = vunpack.c.l.b16 %v192
        %v504 = vunpack.c.h.b16 %v192
        %v505 = vunpack.c.l.b16 %v193
        %v506 = vunpack.c.h.b16 %v193
        %v507 = vunpack.c.l.b16 %v194
        %v508 = vunpack.c.h.b16 %v194
        %v509 = vunpack.c.l.b16 %v195
        %v510 = vunpack.c.h.b16 %v195
        %v511 = vunpack.c.l.b16 %v196
        %v512 = vunpack.c.h.b16 %v196
        %v513 = vunpack.c.l.b16 %v197
        %v514 = vunpack.c.h.b16 %v197
        %v515 = vunpack.c.l.b16 %v198
        %v516 = vunpack.c.h.b16 %v198
        %v517 = vunpack.c.l.b16 %v199
        %v518 = vunpack.c.h.b16 %v199
        %v519 = vunpack.c.l.b16 %v200
        %v520 = vunpack.c.h.b16 %v200
        %v521 = vunpack.c.l.b16 %v201
        %v522 = vunpack.c.h.b16 %v201
        %v523 = vunpack.c.l.b16 %v202
        %v524 = vunpack.c.h.b16 %v202
        %v525 = vunpack.c.l.b16 %v203
        %v526 = vunpack.c.h.b16 %v203
        %v527 = vunpack.c.l.b16 %v204
        %v528 = vunpack.c.h.b16 %v204
        %v529 = vunpack.c.l.b16 %v205
        %v530 = vunpack.c.h.b16 %v205
        %v531 = vunpack.c.l.b16 %v206
        %v532 = vunpack.c.h.b16 %v206
        %v533 = vunpack.c.l.b16 %v207
        %v534 = vunpack.c.h.b16 %v207
        %v535 = vunpack.c.l.b16 %v208
        %v536 = vunpack.c.h.b16 %v208
        %v537 = vunpack.c.l.b16 %v209
        %v538 = vunpack.c.h.b16 %v209
        %v539 = vunpack.c.l.b16 %v210
        %v540 = vunpack.c.h.b16 %v210
        %v541 = vunpack.c.l.b16 %v211
        %v542 = vunpack.c.h.b16 %v211
        %v543 = vunpack.c.l.b16 %v212
        %v544 = vunpack.c.h.b16 %v212
        %v545 = vunpack.c.l.b16 %v213
        %v546 = vunpack.c.h.b16 %v213
        %v547 = vunpack.c.l.b16 %v214
        %v548 = vunpack.c.h.b16 %v214
        %v549 = vunpack.c.l.b16 %v215
        %v550 = vunpack.c.h.b16 %v215
        %v551 = vunpack.c.l.b16 %v216
        %v552 = vunpack.c.h.b16 %v216
        %v553 = vunpack.c.l.b16 %v217
        %v554 = vunpack.c.h.b16 %v217
        %v555 = vunpack.c.l.b16 %v218
        %v556 = vunpack.c.h.b16 %v218
        %v557 = vunpack.c.l.b16 %v219
        %v558 = vunpack.c.h.b16 %v219
        %v559 = vunpack.c.l.b16 %v220
        %v560 = vunpack.c.h.b16 %v220
        %v561 = vunpack.c.l.b16 %v221
        %v562 = vunpack.c.h.b16 %v221
        %v563 = vunpack.c.l.b16 %v222
        %v564 = vunpack.c.h.b16 %v222
        %v565 = vunpack.c.l.b16 %v223
        %v566 = vunpack.c.h.b16 %v223
        %v567 = vunpack.c.l.b16 %v224
        %v568 = vunpack.c.h.b16 %v224
        %v569 = vunpack.c.l.b16 %v225
        %v570 = vunpack.c.h.b16 %v225
        %v571 = vunpack.c.l.b16 %v226
        %v572 = vunpack.c.h.b16 %v226
        %v573 = vunpack.c.l.b16 %v227
        %v574 = vunpack.c.h.b16 %v227
        %v575 = vunpack.c.l.b16 %v228
        %v576 = vunpack.c.h.b16 %v228
        %v577 = vunpack.c.l.b16 %v229
        %v578 = vunpack.c.h.b16 %v229
        %v579 = vunpack.c.l.b16 %v230
        %v580 = vunpack.c.h.b16 %v230
        %v581 = vunpack.c.l.b16 %v231
        %v582 = vunpack.c.h.b16 %v231
        %v583 = vunpack.c.l.b16 %v232
        %v584 = vunpack.c.h.b16 %v232
        %v585 = vunpack.c.l.b16 %v233
        %v586 = vunpack.c.h.b16 %v233
        %v587 = vunpack.c.l.b16 %v234
        %v588 = vunpack.c.h.b16 %v234
        %v589 = vunpack.c.l.b16 %v235
        %v590 = vunpack.c.h.b16 %v235
        %v591 = vunpack.c.l.b16 %v236
        %v592 = vunpack.c.h.b16 %v236
        %v593 = vunpack.c.l.b16 %v237
        %v594 = vunpack.c.h.b16 %v237
        %v595 = vunpack.c.l.b16 %v238
        %v596 = vunpack.c.h.b16 %v238
        %v597 = vunpack.c.l.b16 %v239
        %v598 = vunpack.c.h.b16 %v239
        %v599 = vunpack.c.l.b16 %v240
        %v600 = vunpack.c.h.b16 %v240
        %v601 = vunpack.c.l.b16 %v241
        %v602 = vunpack.c.h.b16 %v241
        %v603 = vunpack.c.l.b16 %v242
        %v604 = vunpack.c.h.b16 %v242
        %v605 = vunpack.c.l.b16 %v243
        %v606 = vunpack.c.h.b16 %v243
        %v607 = vunpack.c.l.b16 %v244
        %v608 = vunpack.c.h.b16 %v244
        %v609 = vunpack.c.l.b16 %v245
        %v610 = vunpack.c.h.b16 %v245
        %v611 = vunpack.c.l.b16 %v246
        %v612 = vunpack.c.h.b16 %v246
        %v613 = vunpack.c.l.b16 %v247
        %v614 = vunpack.c.h.b16 %v247
        %v615 = vunpack.c.l.b16 %v248
        %v616 = vunpack.c.h.b16 %v248
        %v617 = vunpack.c.l.b16 %v249
        %v618 = vunpack.c.h.b16 %v249
        %v619 = vunpack.c.l.b16 %v250
        %v620 = vunpack.c.h.b16 %v250
        %v621 = vunpack.c.l.b16 %v251
        %v622 = vunpack.c.h.b16 %v251
        %v623 = vunpack.c.l.b16 %v252
        %v624 = vunpack.c.h.b16 %v252
        %v625 = vunpack.c.l.b16 %v253
        %v626 = vunpack.c.h.b16 %v253
        %v627 = vunpack.c.l.b16 %v254
        %v628 = vunpack.c.h.b16 %v254
        %v629 = vunpack.c.l.b16 %v255
        %v630 = vunpack.c.h.b16 %v255
        %v631 = vunpack.c.l.b16 %v256
        %v632 = vunpack.c.h.b16 %v256
        %v633 = vunpack.c.l.b16 %v257
        %v634 = vunpack.c.h.b16 %v257
        %v635 = vunpack.c.l.b16 %v258
        %v636 = vunpack.c.h.b16 %v258
        %v637 = vunpack.c.l.b16 %v259
        %v638 = vunpack.c.h.b16 %v259
        %v639 = vunpack.c.l.b16 %v260
        %v640 = vunpack.c.h.b16 %v260
        %v641 = vunpack.c.l.b16 %v261
        %v642 = vunpack.c.h.b16 %v261
        %v643 = vunpack.c.l.b16 %v262
        %v644 = vunpack.c.h.b16 %v262
        %v645 = vunpack.c.l.b16 %v263
        %v646 = vunpack.c.h.b16 %v263
        %v647 = vunpack.c.l.b16 %v264
        %v648 = vunpack.c.h.b16 %v264
        %v649 = vunpack.c.l.b16 %v265
        %v650 = vunpack.c.h.b16 %v265
        %v651 = vunpack.c.l.b16 %v266
        %v652 = vunpack.c.h.b16 %v266
        %v653 = vunpack.c.l.b16 %v267
        %v654 = vunpack.c.h.b16 %v267
        %v655 = vunpack.c.l.b16 %v268
        %v656 = vunpack.c.h.b16 %v268
        %v657 = vunpack.c.l.b16 %v269
        %v658 = vunpack.c.h.b16 %v269
        %v659 = vpack.c.b16 %v435, %v403
        %v660 = vpack.c.b16 %v436, %v404
        %v661 = vpack.c.b16 %v437, %v405
        %v662 = vpack.c.b16 %v438, %v406
        %v663 = vpack.c.b16 %v439, %v407
        %v664 = vpack.c.b16 %v440, %v408
        %v665 = vpack.c.b16 %v441, %v409
        %v666 = vpack.c.b16 %v442, %v410
        %v667 = vpack.c.b16 %v443, %v411
        %v668 = vpack.c.b16 %v444, %v412
        %v669 = vpack.c.b16 %v445, %v413
        %v670 = vpack.c.b16 %v446, %v414
        %v671 = vpack.c.b16 %v447, %v415
        %v672 = vpack.c.b16 %v448, %v416
        %v673 = vpack.c.b16 %v449, %v417
        %v674 = vpack.c.b16 %v450, %v418
        %v675 = vpack.c.b16 %v451, %v419
        %v676 = vpack.c.b16 %v452, %v420
        %v677 = vpack.c.b16 %v453, %v421
        %v678 = vpack.c.b16 %v454, %v422
        %v679 = vpack.c.b16 %v455, %v423
        %v680 = vpack.c.b16 %v456, %v424
        %v681 = vpack.c.b16 %v457, %v425
        %v682 = vpack.c.b16 %v458, %v426
        %v683 = vpack.c.b16 %v459, %v427
        %v684 = vpack.c.b16 %v460, %v428
        %v685 = vpack.c.b16 %v461, %v429
        %v686 = vpack.c.b16 %v462, %v430
        %v687 = vpack.c.b16 %v463, %v431
        %v688 = vpack.c.b16 %v464, %v432
        %v689 = vpack.c.b16 %v465, %v433
        %v690 = vpack.c.b16 %v466, %v434
        %v691 = vpack.c.b16 %v499, %v467
        %v692 = vpack.c.b16 %v500, %v468
        %v693 = vpack.c.b16 %v501, %v469
        %v694 = vpack.c.b16 %v502, %v470
        %v695 = vpack.c.b16 %v503, %v471
        %v696 = vpack.c.b16 %v504, %v472
        %v697 = vpack.c.b16 %v505, %v473
        %v698 = vpack.c.b16 %v506, %v474
        %v699 = vpack.c.b16 %v507, %v475
        %v700 = vpack.c.b16 %v508, %v476
        %v701 = vpack.c.b16 %v509, %v477
        %v702 = vpack.c.b16 %v510, %v478
        %v703 = vpack.c.b16 %v511, %v479
        %v704 = vpack.c.b16 %v512, %v480
        %v705 = vpack.c.b16 %v513, %v481
        %v706 = vpack.c.b16 %v514, %v482
        %v707 = vpack.c.b16 %v515, %v483
        %v708 = vpack.c.b16 %v516, %v484
        %v709 = vpack.c.b16 %v517, %v485
        %v710 = vpack.c.b16 %v518, %v486
        %v711 = vpack.c.b16 %v519, %v487
        %v712 = vpack.c.b16 %v520, %v488
        %v713 = vpack.c.b16 %v521, %v489
        %v714 = vpack.c.b16 %v522, %v490
        %v715 = vpack.c.b16 %v523, %v491
        %v716 = vpack.c.b16 %v524, %v492
        %v717 = vpack.c.b16 %v525, %v493
        %v718 = vpack.c.b16 %v526, %v494
        %v719 = vpack.c.b16 %v527, %v495
        %v720 = vpack.c.b16 %v528, %v496
        %v721 = vpack.c.b16 %v529, %v497
        %v722 = vpack.c.b16 %v530, %v498
        %v723 = vpack.c.b16 %v563, %v531
        %v724 = vpack.c.b16 %v564, %v532
        %v725 = vpack.c.b16 %v565, %v533
        %v726 = vpack.c.b16 %v566, %v534
        %v727 = vpack.c.b16 %v567, %v535
        %v728 = vpack.c.b16 %v568, %v536
        %v729 = vpack.c.b16 %v569, %v537
        %v730 = vpack.c.b16 %v570, %v538
        %v731 = vpack.c.b16 %v571, %v539
        %v732 = vpack.c.b16 %v572, %v540
        %v733 = vpack.c.b16 %v573, %v541
        %v734 = vpack.c.b16 %v574, %v542
        %v735 = vpack.c.b16 %v575, %v543
        %v736 = vpack.c.b16 %v576, %v544
        %v737 = vpack.c.b16 %v577, %v545
        %v738 = vpack.c.b16 %v578, %v546
        %v739 = vpack.c.b16 %v579, %v547
        %v740 = vpack.c.b16 %v580, %v548
        %v741 = vpack.c.b16 %v581, %v549
        %v742 = vpack.c.b16 %v582, %v550
        %v743 = vpack.c.b16 %v583, %v551
        %v744 = vpack.c.b16 %v584, %v552
        %v745 = vpack.c.b16 %v585, %v553
        %v746 = vpack.c.b16 %v586, %v554
        %v747 = vpack.c.b16 %v587, %v555
        %v748 = vpack.c.b16 %v588, %v556
        %v749 = vpack.c.b16 %v589, %v557
        %v750 = vpack.c.b16 %v590, %v558
        %v751 = vpack.c.b16 %v591, %v559
        %v752 = vpack.c.b16 %v592, %v560
        %v753 = vpack.c.b16 %v593, %v561
        %v754 = vpack.c.b16 %v594, %v562
        %v755 = vpack.c.b16 %v627, %v595
        %v756 = vpack.c.b16 %v628, %v596
        %v757 = vpack.c.b16 %v629, %v597
        %v758 = vpack.c.b16 %v630, %v598
        %v759 = vpack.c.b16 %v631, %v599
        %v760 = vpack.c.b16 %v632, %v600
        %v761 = vpack.c.b16 %v633, %v601
        %v762 = vpack.c.b16 %v634, %v602
        %v763 = vpack.c.b16 %v635, %v603
        %v764 = vpack.c.b16 %v636, %v604
        %v765 = vpack.c.b16 %v637, %v605
        %v766 = vpack.c.b16 %v638, %v606
        %v767 = vpack.c.b16 %v639, %v607
        %v768 = vpack.c.b16 %v640, %v608
        %v769 = vpack.c.b16 %v641, %v609
        %v770 = vpack.c.b16 %v642, %v610
        %v771 = vpack.c.b16 %v643, %v611
        %v772 = vpack.c.b16 %v644, %v612
        %v773 = vpack.c.b16 %v645, %v613
        %v774 = vpack.c.b16 %v646, %v614
        %v775 = vpack.c.b16 %v647, %v615
        %v776 = vpack.c.b16 %v648, %v616
        %v777 = vpack.c.b16 %v649, %v617
        %v778 = vpack.c.b16 %v650, %v618
        %v779 = vpack.c.b16 %v651, %v619
        %v780 = vpack.c.b16 %v652, %v620
        %v781 = vpack.c.b16 %v653, %v621
        %v782 = vpack.c.b16 %v654, %v622
        %v783 = vpack.c.b16 %v655, %v623
        %v784 = vpack.c.b16 %v656, %v624
        %v785 = vpack.c.b16 %v657, %v625
        %v786 = vpack.c.b16 %v658, %v626
        %vm915 = vcmask 523264
        %v917 = vsel %vm915, %v274, 0
        %919 = vmatprep.subr.bf16.mxu0 %v660
        %920 = vmatpush1.bf16.msra.mxu0 %v659
        %921 = vmatprep.subr.bf16.mxu0 %v692
        %922 = vmatpush1.bf16.msra.mxu0 %v691
        %923 = vmatprep.subr.bf16.mxu0 %v724
        %924 = vmatpush1.bf16.msra.mxu0 %v723
        %925 = vmatprep.subr.bf16.mxu0 %v756
        %926 = vmatpush1.bf16.msra.mxu0 %v755
        %927 = vmatprep.subr.bf16.mxu0 0
        %928 = vmatpush1.bf16.msra.mxu0 0
        %929 = vmatprep.subr.bf16.mxu0 0
        %930 = vmatpush1.bf16.msra.mxu0 0
        %931 = vmatprep.subr.bf16.mxu0 0
        %932 = vmatpush1.bf16.msra.mxu0 0
        %933 = vmatprep.subr.bf16.mxu0 0
        %934 = vmatpush1.bf16.msra.mxu0 0
        %935 = vmatprep.subr.bf16.mxu0 0
        %936 = vmatpush1.bf16.msra.mxu0 0
        %937 = vmatprep.subr.bf16.mxu0 0
        %938 = vmatpush1.bf16.msra.mxu0 0
        %939 = vmatprep.subr.bf16.mxu0 0
        %940 = vmatpush1.bf16.msra.mxu0 0
        %941 = vmatprep.subr.bf16.mxu0 0
        %942 = vmatpush1.bf16.msra.mxu0 0
        %943 = vmatprep.subr.bf16.mxu0 0
        %944 = vmatpush1.bf16.msra.mxu0 0
        %945 = vmatprep.subr.bf16.mxu0 0
        %946 = vmatpush1.bf16.msra.mxu0 0
        %947 = vmatprep.subr.bf16.mxu0 0
        %948 = vmatpush1.bf16.msra.mxu0 0
        %949 = vmatprep.subr.bf16.mxu0 0
        %950 = vmatpush1.bf16.msra.mxu0 0
        %951 = vmatprep.mubr.bf16.mxu0 0
        %952 = vmatmul.mubr.bf16.gmra.mrb[0].mxu0 %v917
        %v953 = vpop.f32.mrb[0].mxu0
        %v954 = vadd.f32 0.0, %v953
        %v955 = vpop.f32.mrb[0].mxu0
        %v956 = vadd.f32 0.0, %v955
        %v957 = vpop.f32.mrb[0].mxu0
        %v958 = vadd.f32 0.0, %v957
        %v959 = vpop.f32.mrb[0].mxu0
        %v960 = vadd.f32 0.0, %v959
        %961 = vdwg.mxu0
        %962 = vmatprep.subr.bf16.mxu0 %v662
        %963 = vmatpush1.bf16.msra.mxu0 %v661
        %964 = vmatprep.subr.bf16.mxu0 %v694
        %965 = vmatpush1.bf16.msra.mxu0 %v693
        %966 = vmatprep.subr.bf16.mxu0 %v726
        %967 = vmatpush1.bf16.msra.mxu0 %v725
        %968 = vmatprep.subr.bf16.mxu0 %v758
        %969 = vmatpush1.bf16.msra.mxu0 %v757
        %970 = vmatprep.subr.bf16.mxu0 0
        %971 = vmatpush1.bf16.msra.mxu0 0
        %972 = vmatprep.subr.bf16.mxu0 0
        %973 = vmatpush1.bf16.msra.mxu0 0
        %974 = vmatprep.subr.bf16.mxu0 0
        %975 = vmatpush1.bf16.msra.mxu0 0
        %976 = vmatprep.subr.bf16.mxu0 0
        %977 = vmatpush1.bf16.msra.mxu0 0
        %978 = vmatprep.subr.bf16.mxu0 0
        %979 = vmatpush1.bf16.msra.mxu0 0
        %980 = vmatprep.subr.bf16.mxu0 0
        %981 = vmatpush1.bf16.msra.mxu0 0
        %982 = vmatprep.subr.bf16.mxu0 0
        %983 = vmatpush1.bf16.msra.mxu0 0
        %984 = vmatprep.subr.bf16.mxu0 0
        %985 = vmatpush1.bf16.msra.mxu0 0
        %986 = vmatprep.subr.bf16.mxu0 0
        %987 = vmatpush1.bf16.msra.mxu0 0
        %988 = vmatprep.subr.bf16.mxu0 0
        %989 = vmatpush1.bf16.msra.mxu0 0
        %990 = vmatprep.subr.bf16.mxu0 0
        %991 = vmatpush1.bf16.msra.mxu0 0
        %992 = vmatprep.subr.bf16.mxu0 0
        %993 = vmatpush1.bf16.msra.mxu0 0
        %994 = vmatprep.mubr.bf16.mxu0 0
        %995 = vmatmul.mubr.bf16.gmra.mrb[0].mxu0 %v917
        %v996 = vpop.f32.mrb[0].mxu0
        %v997 = vadd.f32 0.0, %v996
        %v998 = vpop.f32.mrb[0].mxu0
        %v999 = vadd.f32 0.0, %v998
        %v1000 = vpop.f32.mrb[0].mxu0
        %v1001 = vadd.f32 0.0, %v1000
        %v1002 = vpop.f32.mrb[0].mxu0
        %v1003 = vadd.f32 0.0, %v1002
        %1004 = vdwg.mxu0
        %1005 = vmatprep.subr.bf16.mxu0 %v664
        %1006 = vmatpush1.bf16.msra.mxu0 %v663
        %1007 = vmatprep.subr.bf16.mxu0 %v696
        %1008 = vmatpush1.bf16.msra.mxu0 %v695
        %1009 = vmatprep.subr.bf16.mxu0 %v728
        %1010 = vmatpush1.bf16.msra.mxu0 %v727
        %1011 = vmatprep.subr.bf16.mxu0 %v760
        %1012 = vmatpush1.bf16.msra.mxu0 %v759
        %1013 = vmatprep.subr.bf16.mxu0 0
        %1014 = vmatpush1.bf16.msra.mxu0 0
        %1015 = vmatprep.subr.bf16.mxu0 0
        %1016 = vmatpush1.bf16.msra.mxu0 0
        %1017 = vmatprep.subr.bf16.mxu0 0
        %1018 = vmatpush1.bf16.msra.mxu0 0
        %1019 = vmatprep.subr.bf16.mxu0 0
        %1020 = vmatpush1.bf16.msra.mxu0 0
        %1021 = vmatprep.subr.bf16.mxu0 0
        %1022 = vmatpush1.bf16.msra.mxu0 0
        %1023 = vmatprep.subr.bf16.mxu0 0
        %1024 = vmatpush1.bf16.msra.mxu0 0
        %1025 = vmatprep.subr.bf16.mxu0 0
        %1026 = vmatpush1.bf16.msra.mxu0 0
        %1027 = vmatprep.subr.bf16.mxu0 0
        %1028 = vmatpush1.bf16.msra.mxu0 0
        %1029 = vmatprep.subr.bf16.mxu0 0
        %1030 = vmatpush1.bf16.msra.mxu0 0
        %1031 = vmatprep.subr.bf16.mxu0 0
        %1032 = vmatpush1.bf16.msra.mxu0 0
        %1033 = vmatprep.subr.bf16.mxu0 0
        %1034 = vmatpush1.bf16.msra.mxu0 0
        %1035 = vmatprep.subr.bf16.mxu0 0
        %1036 = vmatpush1.bf16.msra.mxu0 0
        %1037 = vmatprep.mubr.bf16.mxu0 0
        %1038 = vmatmul.mubr.bf16.gmra.mrb[0].mxu0 %v917
        %v1039 = vpop.f32.mrb[0].mxu0
        %v1040 = vadd.f32 0.0, %v1039
        %v1041 = vpop.f32.mrb[0].mxu0
        %v1042 = vadd.f32 0.0, %v1041
        %v1043 = vpop.f32.mrb[0].mxu0
        %v1044 = vadd.f32 0.0, %v1043
        %v1045 = vpop.f32.mrb[0].mxu0
        %v1046 = vadd.f32 0.0, %v1045
        %1047 = vdwg.mxu0
        %1048 = vmatprep.subr.bf16.mxu0 %v666
        %1049 = vmatpush1.bf16.msra.mxu0 %v665
        %1050 = vmatprep.subr.bf16.mxu0 %v698
        %1051 = vmatpush1.bf16.msra.mxu0 %v697
        %1052 = vmatprep.subr.bf16.mxu0 %v730
        %1053 = vmatpush1.bf16.msra.mxu0 %v729
        %1054 = vmatprep.subr.bf16.mxu0 %v762
        %1055 = vmatpush1.bf16.msra.mxu0 %v761
        %1056 = vmatprep.subr.bf16.mxu0 0
        %1057 = vmatpush1.bf16.msra.mxu0 0
        %1058 = vmatprep.subr.bf16.mxu0 0
        %1059 = vmatpush1.bf16.msra.mxu0 0
        %1060 = vmatprep.subr.bf16.mxu0 0
        %1061 = vmatpush1.bf16.msra.mxu0 0
        %1062 = vmatprep.subr.bf16.mxu0 0
        %1063 = vmatpush1.bf16.msra.mxu0 0
        %1064 = vmatprep.subr.bf16.mxu0 0
        %1065 = vmatpush1.bf16.msra.mxu0 0
        %1066 = vmatprep.subr.bf16.mxu0 0
        %1067 = vmatpush1.bf16.msra.mxu0 0
        %1068 = vmatprep.subr.bf16.mxu0 0
        %1069 = vmatpush1.bf16.msra.mxu0 0
        %1070 = vmatprep.subr.bf16.mxu0 0
        %1071 = vmatpush1.bf16.msra.mxu0 0
        %1072 = vmatprep.subr.bf16.mxu0 0
        %1073 = vmatpush1.bf16.msra.mxu0 0
        %1074 = vmatprep.subr.bf16.mxu0 0
        %1075 = vmatpush1.bf16.msra.mxu0 0
        %1076 = vmatprep.subr.bf16.mxu0 0
        %1077 = vmatpush1.bf16.msra.mxu0 0
        %1078 = vmatprep.subr.bf16.mxu0 0
        %1079 = vmatpush1.bf16.msra.mxu0 0
        %1080 = vmatprep.mubr.bf16.mxu0 0
        %1081 = vmatmul.mubr.bf16.gmra.mrb[0].mxu0 %v917
        %v1082 = vpop.f32.mrb[0].mxu0
        %v1083 = vadd.f32 0.0, %v1082
        %v1084 = vpop.f32.mrb[0].mxu0
        %v1085 = vadd.f32 0.0, %v1084
        %v1086 = vpop.f32.mrb[0].mxu0
        %v1087 = vadd.f32 0.0, %v1086
        %v1088 = vpop.f32.mrb[0].mxu0
        %v1089 = vadd.f32 0.0, %v1088
        %1090 = vdwg.mxu0
        %1091 = vmatprep.subr.bf16.mxu0 %v668
        %1092 = vmatpush1.bf16.msra.mxu0 %v667
        %1093 = vmatprep.subr.bf16.mxu0 %v700
        %1094 = vmatpush1.bf16.msra.mxu0 %v699
        %1095 = vmatprep.subr.bf16.mxu0 %v732
        %1096 = vmatpush1.bf16.msra.mxu0 %v731
        %1097 = vmatprep.subr.bf16.mxu0 %v764
        %1098 = vmatpush1.bf16.msra.mxu0 %v763
        %1099 = vmatprep.subr.bf16.mxu0 0
        %1100 = vmatpush1.bf16.msra.mxu0 0
        %1101 = vmatprep.subr.bf16.mxu0 0
        %1102 = vmatpush1.bf16.msra.mxu0 0
        %1103 = vmatprep.subr.bf16.mxu0 0
        %1104 = vmatpush1.bf16.msra.mxu0 0
        %1105 = vmatprep.subr.bf16.mxu0 0
        %1106 = vmatpush1.bf16.msra.mxu0 0
        %1107 = vmatprep.subr.bf16.mxu0 0
        %1108 = vmatpush1.bf16.msra.mxu0 0
        %1109 = vmatprep.subr.bf16.mxu0 0
        %1110 = vmatpush1.bf16.msra.mxu0 0
        %1111 = vmatprep.subr.bf16.mxu0 0
        %1112 = vmatpush1.bf16.msra.mxu0 0
        %1113 = vmatprep.subr.bf16.mxu0 0
        %1114 = vmatpush1.bf16.msra.mxu0 0
        %1115 = vmatprep.subr.bf16.mxu0 0
        %1116 = vmatpush1.bf16.msra.mxu0 0
        %1117 = vmatprep.subr.bf16.mxu0 0
        %1118 = vmatpush1.bf16.msra.mxu0 0
        %1119 = vmatprep.subr.bf16.mxu0 0
        %1120 = vmatpush1.bf16.msra.mxu0 0
        %1121 = vmatprep.subr.bf16.mxu0 0
        %1122 = vmatpush1.bf16.msra.mxu0 0
        %1123 = vmatprep.mubr.bf16.mxu0 0
        %1124 = vmatmul.mubr.bf16.gmra.mrb[0].mxu0 %v917
        %v1125 = vpop.f32.mrb[0].mxu0
        %v1126 = vadd.f32 0.0, %v1125
        %v1127 = vpop.f32.mrb[0].mxu0
        %v1128 = vadd.f32 0.0, %v1127
        %v1129 = vpop.f32.mrb[0].mxu0
        %v1130 = vadd.f32 0.0, %v1129
        %v1131 = vpop.f32.mrb[0].mxu0
        %v1132 = vadd.f32 0.0, %v1131
        %1133 = vdwg.mxu0
        %1134 = vmatprep.subr.bf16.mxu0 %v670
        %1135 = vmatpush1.bf16.msra.mxu0 %v669
        %1136 = vmatprep.subr.bf16.mxu0 %v702
        %1137 = vmatpush1.bf16.msra.mxu0 %v701
        %1138 = vmatprep.subr.bf16.mxu0 %v734
        %1139 = vmatpush1.bf16.msra.mxu0 %v733
        %1140 = vmatprep.subr.bf16.mxu0 %v766
        %1141 = vmatpush1.bf16.msra.mxu0 %v765
        %1142 = vmatprep.subr.bf16.mxu0 0
        %1143 = vmatpush1.bf16.msra.mxu0 0
        %1144 = vmatprep.subr.bf16.mxu0 0
        %1145 = vmatpush1.bf16.msra.mxu0 0
        %1146 = vmatprep.subr.bf16.mxu0 0
        %1147 = vmatpush1.bf16.msra.mxu0 0
        %1148 = vmatprep.subr.bf16.mxu0 0
        %1149 = vmatpush1.bf16.msra.mxu0 0
        %1150 = vmatprep.subr.bf16.mxu0 0
        %1151 = vmatpush1.bf16.msra.mxu0 0
        %1152 = vmatprep.subr.bf16.mxu0 0
        %1153 = vmatpush1.bf16.msra.mxu0 0
        %1154 = vmatprep.subr.bf16.mxu0 0
        %1155 = vmatpush1.bf16.msra.mxu0 0
        %1156 = vmatprep.subr.bf16.mxu0 0
        %1157 = vmatpush1.bf16.msra.mxu0 0
        %1158 = vmatprep.subr.bf16.mxu0 0
        %1159 = vmatpush1.bf16.msra.mxu0 0
        %1160 = vmatprep.subr.bf16.mxu0 0
        %1161 = vmatpush1.bf16.msra.mxu0 0
        %1162 = vmatprep.subr.bf16.mxu0 0
        %1163 = vmatpush1.bf16.msra.mxu0 0
        %1164 = vmatprep.subr.bf16.mxu0 0
        %1165 = vmatpush1.bf16.msra.mxu0 0
        %1166 = vmatprep.mubr.bf16.mxu0 0
        %1167 = vmatmul.mubr.bf16.gmra.mrb[0].mxu0 %v917
        %v1168 = vpop.f32.mrb[0].mxu0
        %v1169 = vadd.f32 0.0, %v1168
        %v1170 = vpop.f32.mrb[0].mxu0
        %v1171 = vadd.f32 0.0, %v1170
        %v1172 = vpop.f32.mrb[0].mxu0
        %v1173 = vadd.f32 0.0, %v1172
        %v1174 = vpop.f32.mrb[0].mxu0
        %v1175 = vadd.f32 0.0, %v1174
        %1176 = vdwg.mxu0
        %1177 = vmatprep.subr.bf16.mxu0 %v672
        %1178 = vmatpush1.bf16.msra.mxu0 %v671
        %1179 = vmatprep.subr.bf16.mxu0 %v704
        %1180 = vmatpush1.bf16.msra.mxu0 %v703
        %1181 = vmatprep.subr.bf16.mxu0 %v736
        %1182 = vmatpush1.bf16.msra.mxu0 %v735
        %1183 = vmatprep.subr.bf16.mxu0 %v768
        %1184 = vmatpush1.bf16.msra.mxu0 %v767
        %1185 = vmatprep.subr.bf16.mxu0 0
        %1186 = vmatpush1.bf16.msra.mxu0 0
        %1187 = vmatprep.subr.bf16.mxu0 0
        %1188 = vmatpush1.bf16.msra.mxu0 0
        %1189 = vmatprep.subr.bf16.mxu0 0
        %1190 = vmatpush1.bf16.msra.mxu0 0
        %1191 = vmatprep.subr.bf16.mxu0 0
        %1192 = vmatpush1.bf16.msra.mxu0 0
        %1193 = vmatprep.subr.bf16.mxu0 0
        %1194 = vmatpush1.bf16.msra.mxu0 0
        %1195 = vmatprep.subr.bf16.mxu0 0
        %1196 = vmatpush1.bf16.msra.mxu0 0
        %1197 = vmatprep.subr.bf16.mxu0 0
        %1198 = vmatpush1.bf16.msra.mxu0 0
        %1199 = vmatprep.subr.bf16.mxu0 0
        %1200 = vmatpush1.bf16.msra.mxu0 0
        %1201 = vmatprep.subr.bf16.mxu0 0
        %1202 = vmatpush1.bf16.msra.mxu0 0
        %1203 = vmatprep.subr.bf16.mxu0 0
        %1204 = vmatpush1.bf16.msra.mxu0 0
        %1205 = vmatprep.subr.bf16.mxu0 0
        %1206 = vmatpush1.bf16.msra.mxu0 0
        %1207 = vmatprep.subr.bf16.mxu0 0
        %1208 = vmatpush1.bf16.msra.mxu0 0
        %1209 = vmatprep.mubr.bf16.mxu0 0
        %1210 = vmatmul.mubr.bf16.gmra.mrb[0].mxu0 %v917
        %v1211 = vpop.f32.mrb[0].mxu0
        %v1212 = vadd.f32 0.0, %v1211
        %v1213 = vpop.f32.mrb[0].mxu0
        %v1214 = vadd.f32 0.0, %v1213
        %v1215 = vpop.f32.mrb[0].mxu0
        %v1216 = vadd.f32 0.0, %v1215
        %v1217 = vpop.f32.mrb[0].mxu0
        %v1218 = vadd.f32 0.0, %v1217
        %1219 = vdwg.mxu0
        %1220 = vmatprep.subr.bf16.mxu0 %v674
        %1221 = vmatpush1.bf16.msra.mxu0 %v673
        %1222 = vmatprep.subr.bf16.mxu0 %v706
        %1223 = vmatpush1.bf16.msra.mxu0 %v705
        %1224 = vmatprep.subr.bf16.mxu0 %v738
        %1225 = vmatpush1.bf16.msra.mxu0 %v737
        %1226 = vmatprep.subr.bf16.mxu0 %v770
        %1227 = vmatpush1.bf16.msra.mxu0 %v769
        %1228 = vmatprep.subr.bf16.mxu0 0
        %1229 = vmatpush1.bf16.msra.mxu0 0
        %1230 = vmatprep.subr.bf16.mxu0 0
        %1231 = vmatpush1.bf16.msra.mxu0 0
        %1232 = vmatprep.subr.bf16.mxu0 0
        %1233 = vmatpush1.bf16.msra.mxu0 0
        %1234 = vmatprep.subr.bf16.mxu0 0
        %1235 = vmatpush1.bf16.msra.mxu0 0
        %1236 = vmatprep.subr.bf16.mxu0 0
        %1237 = vmatpush1.bf16.msra.mxu0 0
        %1238 = vmatprep.subr.bf16.mxu0 0
        %1239 = vmatpush1.bf16.msra.mxu0 0
        %1240 = vmatprep.subr.bf16.mxu0 0
        %1241 = vmatpush1.bf16.msra.mxu0 0
        %1242 = vmatprep.subr.bf16.mxu0 0
        %1243 = vmatpush1.bf16.msra.mxu0 0
        %1244 = vmatprep.subr.bf16.mxu0 0
        %1245 = vmatpush1.bf16.msra.mxu0 0
        %1246 = vmatprep.subr.bf16.mxu0 0
        %1247 = vmatpush1.bf16.msra.mxu0 0
        %1248 = vmatprep.subr.bf16.mxu0 0
        %1249 = vmatpush1.bf16.msra.mxu0 0
        %1250 = vmatprep.subr.bf16.mxu0 0
        %1251 = vmatpush1.bf16.msra.mxu0 0
        %1252 = vmatprep.mubr.bf16.mxu0 0
        %1253 = vmatmul.mubr.bf16.gmra.mrb[0].mxu0 %v917
        %v1254 = vpop.f32.mrb[0].mxu0
        %v1255 = vadd.f32 0.0, %v1254
        %v1256 = vpop.f32.mrb[0].mxu0
        %v1257 = vadd.f32 0.0, %v1256
        %v1258 = vpop.f32.mrb[0].mxu0
        %v1259 = vadd.f32 0.0, %v1258
        %v1260 = vpop.f32.mrb[0].mxu0
        %v1261 = vadd.f32 0.0, %v1260
        %1262 = vdwg.mxu0
        %1263 = vmatprep.subr.bf16.mxu0 %v676
        %1264 = vmatpush1.bf16.msra.mxu0 %v675
        %1265 = vmatprep.subr.bf16.mxu0 %v708
        %1266 = vmatpush1.bf16.msra.mxu0 %v707
        %1267 = vmatprep.subr.bf16.mxu0 %v740
        %1268 = vmatpush1.bf16.msra.mxu0 %v739
        %1269 = vmatprep.subr.bf16.mxu0 %v772
        %1270 = vmatpush1.bf16.msra.mxu0 %v771
        %1271 = vmatprep.subr.bf16.mxu0 0
        %1272 = vmatpush1.bf16.msra.mxu0 0
        %1273 = vmatprep.subr.bf16.mxu0 0
        %1274 = vmatpush1.bf16.msra.mxu0 0
        %1275 = vmatprep.subr.bf16.mxu0 0
        %1276 = vmatpush1.bf16.msra.mxu0 0
        %1277 = vmatprep.subr.bf16.mxu0 0
        %1278 = vmatpush1.bf16.msra.mxu0 0
        %1279 = vmatprep.subr.bf16.mxu0 0
        %1280 = vmatpush1.bf16.msra.mxu0 0
        %1281 = vmatprep.subr.bf16.mxu0 0
        %1282 = vmatpush1.bf16.msra.mxu0 0
        %1283 = vmatprep.subr.bf16.mxu0 0
        %1284 = vmatpush1.bf16.msra.mxu0 0
        %1285 = vmatprep.subr.bf16.mxu0 0
        %1286 = vmatpush1.bf16.msra.mxu0 0
        %1287 = vmatprep.subr.bf16.mxu0 0
        %1288 = vmatpush1.bf16.msra.mxu0 0
        %1289 = vmatprep.subr.bf16.mxu0 0
        %1290 = vmatpush1.bf16.msra.mxu0 0
        %1291 = vmatprep.subr.bf16.mxu0 0
        %1292 = vmatpush1.bf16.msra.mxu0 0
        %1293 = vmatprep.subr.bf16.mxu0 0
        %1294 = vmatpush1.bf16.msra.mxu0 0
        %1295 = vmatprep.mubr.bf16.mxu0 0
        %1296 = vmatmul.mubr.bf16.gmra.mrb[0].mxu0 %v917
        %v1297 = vpop.f32.mrb[0].mxu0
        %v1298 = vadd.f32 0.0, %v1297
        %v1299 = vpop.f32.mrb[0].mxu0
        %v1300 = vadd.f32 0.0, %v1299
        %v1301 = vpop.f32.mrb[0].mxu0
        %v1302 = vadd.f32 0.0, %v1301
        %v1303 = vpop.f32.mrb[0].mxu0
        %v1304 = vadd.f32 0.0, %v1303
        %1305 = vdwg.mxu0
        %1306 = vmatprep.subr.bf16.mxu0 %v678
        %1307 = vmatpush1.bf16.msra.mxu0 %v677
        %1308 = vmatprep.subr.bf16.mxu0 %v710
        %1309 = vmatpush1.bf16.msra.mxu0 %v709
        %1310 = vmatprep.subr.bf16.mxu0 %v742
        %1311 = vmatpush1.bf16.msra.mxu0 %v741
        %1312 = vmatprep.subr.bf16.mxu0 %v774
        %1313 = vmatpush1.bf16.msra.mxu0 %v773
        %1314 = vmatprep.subr.bf16.mxu0 0
        %1315 = vmatpush1.bf16.msra.mxu0 0
        %1316 = vmatprep.subr.bf16.mxu0 0
        %1317 = vmatpush1.bf16.msra.mxu0 0
        %1318 = vmatprep.subr.bf16.mxu0 0
        %1319 = vmatpush1.bf16.msra.mxu0 0
        %1320 = vmatprep.subr.bf16.mxu0 0
        %1321 = vmatpush1.bf16.msra.mxu0 0
        %1322 = vmatprep.subr.bf16.mxu0 0
        %1323 = vmatpush1.bf16.msra.mxu0 0
        %1324 = vmatprep.subr.bf16.mxu0 0
        %1325 = vmatpush1.bf16.msra.mxu0 0
        %1326 = vmatprep.subr.bf16.mxu0 0
        %1327 = vmatpush1.bf16.msra.mxu0 0
        %1328 = vmatprep.subr.bf16.mxu0 0
        %1329 = vmatpush1.bf16.msra.mxu0 0
        %1330 = vmatprep.subr.bf16.mxu0 0
        %1331 = vmatpush1.bf16.msra.mxu0 0
        %1332 = vmatprep.subr.bf16.mxu0 0
        %1333 = vmatpush1.bf16.msra.mxu0 0
        %1334 = vmatprep.subr.bf16.mxu0 0
        %1335 = vmatpush1.bf16.msra.mxu0 0
        %1336 = vmatprep.subr.bf16.mxu0 0
        %1337 = vmatpush1.bf16.msra.mxu0 0
        %1338 = vmatprep.mubr.bf16.mxu0 0
        %1339 = vmatmul.mubr.bf16.gmra.mrb[0].mxu0 %v917
        %v1340 = vpop.f32.mrb[0].mxu0
        %v1341 = vadd.f32 0.0, %v1340
        %v1342 = vpop.f32.mrb[0].mxu0
        %v1343 = vadd.f32 0.0, %v1342
        %v1344 = vpop.f32.mrb[0].mxu0
        %v1345 = vadd.f32 0.0, %v1344
        %v1346 = vpop.f32.mrb[0].mxu0
        %v1347 = vadd.f32 0.0, %v1346
        %1348 = vdwg.mxu0
        %1349 = vmatprep.subr.bf16.mxu0 %v680
        %1350 = vmatpush1.bf16.msra.mxu0 %v679
        %1351 = vmatprep.subr.bf16.mxu0 %v712
        %1352 = vmatpush1.bf16.msra.mxu0 %v711
        %1353 = vmatprep.subr.bf16.mxu0 %v744
        %1354 = vmatpush1.bf16.msra.mxu0 %v743
        %1355 = vmatprep.subr.bf16.mxu0 %v776
        %1356 = vmatpush1.bf16.msra.mxu0 %v775
        %1357 = vmatprep.subr.bf16.mxu0 0
        %1358 = vmatpush1.bf16.msra.mxu0 0
        %1359 = vmatprep.subr.bf16.mxu0 0
        %1360 = vmatpush1.bf16.msra.mxu0 0
        %1361 = vmatprep.subr.bf16.mxu0 0
        %1362 = vmatpush1.bf16.msra.mxu0 0
        %1363 = vmatprep.subr.bf16.mxu0 0
        %1364 = vmatpush1.bf16.msra.mxu0 0
        %1365 = vmatprep.subr.bf16.mxu0 0
        %1366 = vmatpush1.bf16.msra.mxu0 0
        %1367 = vmatprep.subr.bf16.mxu0 0
        %1368 = vmatpush1.bf16.msra.mxu0 0
        %1369 = vmatprep.subr.bf16.mxu0 0
        %1370 = vmatpush1.bf16.msra.mxu0 0
        %1371 = vmatprep.subr.bf16.mxu0 0
        %1372 = vmatpush1.bf16.msra.mxu0 0
        %1373 = vmatprep.subr.bf16.mxu0 0
        %1374 = vmatpush1.bf16.msra.mxu0 0
        %1375 = vmatprep.subr.bf16.mxu0 0
        %1376 = vmatpush1.bf16.msra.mxu0 0
        %1377 = vmatprep.subr.bf16.mxu0 0
        %1378 = vmatpush1.bf16.msra.mxu0 0
        %1379 = vmatprep.subr.bf16.mxu0 0
        %1380 = vmatpush1.bf16.msra.mxu0 0
        %1381 = vmatprep.mubr.bf16.mxu0 0
        %1382 = vmatmul.mubr.bf16.gmra.mrb[0].mxu0 %v917
        %v1383 = vpop.f32.mrb[0].mxu0
        %v1384 = vadd.f32 0.0, %v1383
        %v1385 = vpop.f32.mrb[0].mxu0
        %v1386 = vadd.f32 0.0, %v1385
        %v1387 = vpop.f32.mrb[0].mxu0
        %v1388 = vadd.f32 0.0, %v1387
        %v1389 = vpop.f32.mrb[0].mxu0
        %v1390 = vadd.f32 0.0, %v1389
        %1391 = vdwg.mxu0
        %1392 = vmatprep.subr.bf16.mxu0 %v682
        %1393 = vmatpush1.bf16.msra.mxu0 %v681
        %1394 = vmatprep.subr.bf16.mxu0 %v714
        %1395 = vmatpush1.bf16.msra.mxu0 %v713
        %1396 = vmatprep.subr.bf16.mxu0 %v746
        %1397 = vmatpush1.bf16.msra.mxu0 %v745
        %1398 = vmatprep.subr.bf16.mxu0 %v778
        %1399 = vmatpush1.bf16.msra.mxu0 %v777
        %1400 = vmatprep.subr.bf16.mxu0 0
        %1401 = vmatpush1.bf16.msra.mxu0 0
        %1402 = vmatprep.subr.bf16.mxu0 0
        %1403 = vmatpush1.bf16.msra.mxu0 0
        %1404 = vmatprep.subr.bf16.mxu0 0
        %1405 = vmatpush1.bf16.msra.mxu0 0
        %1406 = vmatprep.subr.bf16.mxu0 0
        %1407 = vmatpush1.bf16.msra.mxu0 0
        %1408 = vmatprep.subr.bf16.mxu0 0
        %1409 = vmatpush1.bf16.msra.mxu0 0
        %1410 = vmatprep.subr.bf16.mxu0 0
        %1411 = vmatpush1.bf16.msra.mxu0 0
        %1412 = vmatprep.subr.bf16.mxu0 0
        %1413 = vmatpush1.bf16.msra.mxu0 0
        %1414 = vmatprep.subr.bf16.mxu0 0
        %1415 = vmatpush1.bf16.msra.mxu0 0
        %1416 = vmatprep.subr.bf16.mxu0 0
        %1417 = vmatpush1.bf16.msra.mxu0 0
        %1418 = vmatprep.subr.bf16.mxu0 0
        %1419 = vmatpush1.bf16.msra.mxu0 0
        %1420 = vmatprep.subr.bf16.mxu0 0
        %1421 = vmatpush1.bf16.msra.mxu0 0
        %1422 = vmatprep.subr.bf16.mxu0 0
        %1423 = vmatpush1.bf16.msra.mxu0 0
        %1424 = vmatprep.mubr.bf16.mxu0 0
        %1425 = vmatmul.mubr.bf16.gmra.mrb[0].mxu0 %v917
        %v1426 = vpop.f32.mrb[0].mxu0
        %v1427 = vadd.f32 0.0, %v1426
        %v1428 = vpop.f32.mrb[0].mxu0
        %v1429 = vadd.f32 0.0, %v1428
        %v1430 = vpop.f32.mrb[0].mxu0
        %v1431 = vadd.f32 0.0, %v1430
        %v1432 = vpop.f32.mrb[0].mxu0
        %v1433 = vadd.f32 0.0, %v1432
        %1434 = vdwg.mxu0
        %1435 = vmatprep.subr.bf16.mxu0 %v684
        %1436 = vmatpush1.bf16.msra.mxu0 %v683
        %1437 = vmatprep.subr.bf16.mxu0 %v716
        %1438 = vmatpush1.bf16.msra.mxu0 %v715
        %1439 = vmatprep.subr.bf16.mxu0 %v748
        %1440 = vmatpush1.bf16.msra.mxu0 %v747
        %1441 = vmatprep.subr.bf16.mxu0 %v780
        %1442 = vmatpush1.bf16.msra.mxu0 %v779
        %1443 = vmatprep.subr.bf16.mxu0 0
        %1444 = vmatpush1.bf16.msra.mxu0 0
        %1445 = vmatprep.subr.bf16.mxu0 0
        %1446 = vmatpush1.bf16.msra.mxu0 0
        %1447 = vmatprep.subr.bf16.mxu0 0
        %1448 = vmatpush1.bf16.msra.mxu0 0
        %1449 = vmatprep.subr.bf16.mxu0 0
        %1450 = vmatpush1.bf16.msra.mxu0 0
        %1451 = vmatprep.subr.bf16.mxu0 0
        %1452 = vmatpush1.bf16.msra.mxu0 0
        %1453 = vmatprep.subr.bf16.mxu0 0
        %1454 = vmatpush1.bf16.msra.mxu0 0
        %1455 = vmatprep.subr.bf16.mxu0 0
        %1456 = vmatpush1.bf16.msra.mxu0 0
        %1457 = vmatprep.subr.bf16.mxu0 0
        %1458 = vmatpush1.bf16.msra.mxu0 0
        %1459 = vmatprep.subr.bf16.mxu0 0
        %1460 = vmatpush1.bf16.msra.mxu0 0
        %1461 = vmatprep.subr.bf16.mxu0 0
        %1462 = vmatpush1.bf16.msra.mxu0 0
        %1463 = vmatprep.subr.bf16.mxu0 0
        %1464 = vmatpush1.bf16.msra.mxu0 0
        %1465 = vmatprep.subr.bf16.mxu0 0
        %1466 = vmatpush1.bf16.msra.mxu0 0
        %1467 = vmatprep.mubr.bf16.mxu0 0
        %1468 = vmatmul.mubr.bf16.gmra.mrb[0].mxu0 %v917
        %v1469 = vpop.f32.mrb[0].mxu0
        %v1470 = vadd.f32 0.0, %v1469
        %v1471 = vpop.f32.mrb[0].mxu0
        %v1472 = vadd.f32 0.0, %v1471
        %v1473 = vpop.f32.mrb[0].mxu0
        %v1474 = vadd.f32 0.0, %v1473
        %v1475 = vpop.f32.mrb[0].mxu0
        %v1476 = vadd.f32 0.0, %v1475
        %1477 = vdwg.mxu0
        %1478 = vmatprep.subr.bf16.mxu0 %v686
        %1479 = vmatpush1.bf16.msra.mxu0 %v685
        %1480 = vmatprep.subr.bf16.mxu0 %v718
        %1481 = vmatpush1.bf16.msra.mxu0 %v717
        %1482 = vmatprep.subr.bf16.mxu0 %v750
        %1483 = vmatpush1.bf16.msra.mxu0 %v749
        %1484 = vmatprep.subr.bf16.mxu0 %v782
        %1485 = vmatpush1.bf16.msra.mxu0 %v781
        %1486 = vmatprep.subr.bf16.mxu0 0
        %1487 = vmatpush1.bf16.msra.mxu0 0
        %1488 = vmatprep.subr.bf16.mxu0 0
        %1489 = vmatpush1.bf16.msra.mxu0 0
        %1490 = vmatprep.subr.bf16.mxu0 0
        %1491 = vmatpush1.bf16.msra.mxu0 0
        %1492 = vmatprep.subr.bf16.mxu0 0
        %1493 = vmatpush1.bf16.msra.mxu0 0
        %1494 = vmatprep.subr.bf16.mxu0 0
        %1495 = vmatpush1.bf16.msra.mxu0 0
        %1496 = vmatprep.subr.bf16.mxu0 0
        %1497 = vmatpush1.bf16.msra.mxu0 0
        %1498 = vmatprep.subr.bf16.mxu0 0
        %1499 = vmatpush1.bf16.msra.mxu0 0
        %1500 = vmatprep.subr.bf16.mxu0 0
        %1501 = vmatpush1.bf16.msra.mxu0 0
        %1502 = vmatprep.subr.bf16.mxu0 0
        %1503 = vmatpush1.bf16.msra.mxu0 0
        %1504 = vmatprep.subr.bf16.mxu0 0
        %1505 = vmatpush1.bf16.msra.mxu0 0
        %1506 = vmatprep.subr.bf16.mxu0 0
        %1507 = vmatpush1.bf16.msra.mxu0 0
        %1508 = vmatprep.subr.bf16.mxu0 0
        %1509 = vmatpush1.bf16.msra.mxu0 0
        %1510 = vmatprep.mubr.bf16.mxu0 0
        %1511 = vmatmul.mubr.bf16.gmra.mrb[0].mxu0 %v917
        %v1512 = vpop.f32.mrb[0].mxu0
        %v1513 = vadd.f32 0.0, %v1512
        %v1514 = vpop.f32.mrb[0].mxu0
        %v1515 = vadd.f32 0.0, %v1514
        %v1516 = vpop.f32.mrb[0].mxu0
        %v1517 = vadd.f32 0.0, %v1516
        %v1518 = vpop.f32.mrb[0].mxu0
        %v1519 = vadd.f32 0.0, %v1518
        %1520 = vdwg.mxu0
        %1521 = vmatprep.subr.bf16.mxu0 %v688
        %1522 = vmatpush1.bf16.msra.mxu0 %v687
        %1523 = vmatprep.subr.bf16.mxu0 %v720
        %1524 = vmatpush1.bf16.msra.mxu0 %v719
        %1525 = vmatprep.subr.bf16.mxu0 %v752
        %1526 = vmatpush1.bf16.msra.mxu0 %v751
        %1527 = vmatprep.subr.bf16.mxu0 %v784
        %1528 = vmatpush1.bf16.msra.mxu0 %v783
        %1529 = vmatprep.subr.bf16.mxu0 0
        %1530 = vmatpush1.bf16.msra.mxu0 0
        %1531 = vmatprep.subr.bf16.mxu0 0
        %1532 = vmatpush1.bf16.msra.mxu0 0
        %1533 = vmatprep.subr.bf16.mxu0 0
        %1534 = vmatpush1.bf16.msra.mxu0 0
        %1535 = vmatprep.subr.bf16.mxu0 0
        %1536 = vmatpush1.bf16.msra.mxu0 0
        %1537 = vmatprep.subr.bf16.mxu0 0
        %1538 = vmatpush1.bf16.msra.mxu0 0
        %1539 = vmatprep.subr.bf16.mxu0 0
        %1540 = vmatpush1.bf16.msra.mxu0 0
        %1541 = vmatprep.subr.bf16.mxu0 0
        %1542 = vmatpush1.bf16.msra.mxu0 0
        %1543 = vmatprep.subr.bf16.mxu0 0
        %1544 = vmatpush1.bf16.msra.mxu0 0
        %1545 = vmatprep.subr.bf16.mxu0 0
        %1546 = vmatpush1.bf16.msra.mxu0 0
        %1547 = vmatprep.subr.bf16.mxu0 0
        %1548 = vmatpush1.bf16.msra.mxu0 0
        %1549 = vmatprep.subr.bf16.mxu0 0
        %1550 = vmatpush1.bf16.msra.mxu0 0
        %1551 = vmatprep.subr.bf16.mxu0 0
        %1552 = vmatpush1.bf16.msra.mxu0 0
        %1553 = vmatprep.mubr.bf16.mxu0 0
        %1554 = vmatmul.mubr.bf16.gmra.mrb[0].mxu0 %v917
        %v1555 = vpop.f32.mrb[0].mxu0
        %v1556 = vadd.f32 0.0, %v1555
        %v1557 = vpop.f32.mrb[0].mxu0
        %v1558 = vadd.f32 0.0, %v1557
        %v1559 = vpop.f32.mrb[0].mxu0
        %v1560 = vadd.f32 0.0, %v1559
        %v1561 = vpop.f32.mrb[0].mxu0
        %v1562 = vadd.f32 0.0, %v1561
        %1563 = vdwg.mxu0
        %1564 = vmatprep.subr.bf16.mxu0 %v690
        %1565 = vmatpush1.bf16.msra.mxu0 %v689
        %1566 = vmatprep.subr.bf16.mxu0 %v722
        %1567 = vmatpush1.bf16.msra.mxu0 %v721
        %1568 = vmatprep.subr.bf16.mxu0 %v754
        %1569 = vmatpush1.bf16.msra.mxu0 %v753
        %1570 = vmatprep.subr.bf16.mxu0 %v786
        %1571 = vmatpush1.bf16.msra.mxu0 %v785
        %1572 = vmatprep.subr.bf16.mxu0 0
        %1573 = vmatpush1.bf16.msra.mxu0 0
        %1574 = vmatprep.subr.bf16.mxu0 0
        %1575 = vmatpush1.bf16.msra.mxu0 0
        %1576 = vmatprep.subr.bf16.mxu0 0
        %1577 = vmatpush1.bf16.msra.mxu0 0
        %1578 = vmatprep.subr.bf16.mxu0 0
        %1579 = vmatpush1.bf16.msra.mxu0 0
        %1580 = vmatprep.subr.bf16.mxu0 0
        %1581 = vmatpush1.bf16.msra.mxu0 0
        %1582 = vmatprep.subr.bf16.mxu0 0
        %1583 = vmatpush1.bf16.msra.mxu0 0
        %1584 = vmatprep.subr.bf16.mxu0 0
        %1585 = vmatpush1.bf16.msra.mxu0 0
        %1586 = vmatprep.subr.bf16.mxu0 0
        %1587 = vmatpush1.bf16.msra.mxu0 0
        %1588 = vmatprep.subr.bf16.mxu0 0
        %1589 = vmatpush1.bf16.msra.mxu0 0
        %1590 = vmatprep.subr.bf16.mxu0 0
        %1591 = vmatpush1.bf16.msra.mxu0 0
        %1592 = vmatprep.subr.bf16.mxu0 0
        %1593 = vmatpush1.bf16.msra.mxu0 0
        %1594 = vmatprep.subr.bf16.mxu0 0
        %1595 = vmatpush1.bf16.msra.mxu0 0
        %1596 = vmatprep.mubr.bf16.mxu0 0
        %1597 = vmatmul.mubr.bf16.gmra.mrb[0].mxu0 %v917
        %v1598 = vpop.f32.mrb[0].mxu0
        %v1599 = vadd.f32 0.0, %v1598
        %v1600 = vpop.f32.mrb[0].mxu0
        %v1601 = vadd.f32 0.0, %v1600
        %v1602 = vpop.f32.mrb[0].mxu0
        %v1603 = vadd.f32 0.0, %v1602
        %v1604 = vpop.f32.mrb[0].mxu0
        %v1605 = vadd.f32 0.0, %v1604
        %1606 = vdwg.mxu0
        %v1607 = vpack.c.bf16 %v958, %v954
        %v1608 = vpack.c.bf16 %v960, %v956
        %v1609 = vpack.c.bf16 %v1001, %v997
        %v1610 = vpack.c.bf16 %v1003, %v999
        %v1611 = vpack.c.bf16 %v1044, %v1040
        %v1612 = vpack.c.bf16 %v1046, %v1042
        %v1613 = vpack.c.bf16 %v1087, %v1083
        %v1614 = vpack.c.bf16 %v1089, %v1085
        %v1615 = vpack.c.bf16 %v1130, %v1126
        %v1616 = vpack.c.bf16 %v1132, %v1128
        %v1617 = vpack.c.bf16 %v1173, %v1169
        %v1618 = vpack.c.bf16 %v1175, %v1171
        %v1619 = vpack.c.bf16 %v1216, %v1212
        %v1620 = vpack.c.bf16 %v1218, %v1214
        %v1621 = vpack.c.bf16 %v1259, %v1255
        %v1622 = vpack.c.bf16 %v1261, %v1257
        %v1623 = vpack.c.bf16 %v1302, %v1298
        %v1624 = vpack.c.bf16 %v1304, %v1300
        %v1625 = vpack.c.bf16 %v1345, %v1341
        %v1626 = vpack.c.bf16 %v1347, %v1343
        %v1627 = vpack.c.bf16 %v1388, %v1384
        %v1628 = vpack.c.bf16 %v1390, %v1386
        %v1629 = vpack.c.bf16 %v1431, %v1427
        %v1630 = vpack.c.bf16 %v1433, %v1429
        %v1631 = vpack.c.bf16 %v1474, %v1470
        %v1632 = vpack.c.bf16 %v1476, %v1472
        %v1633 = vpack.c.bf16 %v1517, %v1513
        %v1634 = vpack.c.bf16 %v1519, %v1515
        %v1635 = vpack.c.bf16 %v1560, %v1556
        %v1636 = vpack.c.bf16 %v1562, %v1558
        %v1637 = vpack.c.bf16 %v1603, %v1599
        %v1638 = vpack.c.bf16 %v1605, %v1601
        %v1671 = vunpack.c.l.b16 %v1607
        %v1672 = vunpack.c.l.b16 %v1608
        %v1673 = vunpack.c.l.b16 %v1609
        %v1674 = vunpack.c.l.b16 %v1610
        %v1675 = vunpack.c.l.b16 %v1611
        %v1676 = vunpack.c.l.b16 %v1612
        %v1677 = vunpack.c.l.b16 %v1613
        %v1678 = vunpack.c.l.b16 %v1614
        %v1679 = vunpack.c.l.b16 %v1615
        %v1680 = vunpack.c.l.b16 %v1616
        %v1681 = vunpack.c.l.b16 %v1617
        %v1682 = vunpack.c.l.b16 %v1618
        %v1683 = vunpack.c.l.b16 %v1619
        %v1684 = vunpack.c.l.b16 %v1620
        %v1685 = vunpack.c.l.b16 %v1621
        %v1686 = vunpack.c.l.b16 %v1622
        %v1687 = vunpack.c.l.b16 %v1623
        %v1688 = vunpack.c.l.b16 %v1624
        %v1689 = vunpack.c.l.b16 %v1625
        %v1690 = vunpack.c.l.b16 %v1626
        %v1691 = vunpack.c.l.b16 %v1627
        %v1692 = vunpack.c.l.b16 %v1628
        %v1693 = vunpack.c.l.b16 %v1629
        %v1694 = vunpack.c.l.b16 %v1630
        %v1695 = vunpack.c.l.b16 %v1631
        %v1696 = vunpack.c.l.b16 %v1632
        %v1697 = vunpack.c.l.b16 %v1633
        %v1698 = vunpack.c.l.b16 %v1634
        %v1699 = vunpack.c.l.b16 %v1635
        %v1700 = vunpack.c.l.b16 %v1636
        %v1701 = vunpack.c.l.b16 %v1637
        %v1702 = vunpack.c.l.b16 %v1638
        %v1703 = vunpack.c.h.b16 %v1607
        %v1704 = vunpack.c.h.b16 %v1608
        %v1705 = vunpack.c.h.b16 %v1609
        %v1706 = vunpack.c.h.b16 %v1610
        %v1707 = vunpack.c.h.b16 %v1611
        %v1708 = vunpack.c.h.b16 %v1612
        %v1709 = vunpack.c.h.b16 %v1613
        %v1710 = vunpack.c.h.b16 %v1614
        %v1711 = vunpack.c.h.b16 %v1615
        %v1712 = vunpack.c.h.b16 %v1616
        %v1713 = vunpack.c.h.b16 %v1617
        %v1714 = vunpack.c.h.b16 %v1618
        %v1715 = vunpack.c.h.b16 %v1619
        %v1716 = vunpack.c.h.b16 %v1620
        %v1717 = vunpack.c.h.b16 %v1621
        %v1718 = vunpack.c.h.b16 %v1622
        %v1719 = vunpack.c.h.b16 %v1623
        %v1720 = vunpack.c.h.b16 %v1624
        %v1721 = vunpack.c.h.b16 %v1625
        %v1722 = vunpack.c.h.b16 %v1626
        %v1723 = vunpack.c.h.b16 %v1627
        %v1724 = vunpack.c.h.b16 %v1628
        %v1725 = vunpack.c.h.b16 %v1629
        %v1726 = vunpack.c.h.b16 %v1630
        %v1727 = vunpack.c.h.b16 %v1631
        %v1728 = vunpack.c.h.b16 %v1632
        %v1729 = vunpack.c.h.b16 %v1633
        %v1730 = vunpack.c.h.b16 %v1634
        %v1731 = vunpack.c.h.b16 %v1635
        %v1732 = vunpack.c.h.b16 %v1636
        %v1733 = vunpack.c.h.b16 %v1637
        %v1734 = vunpack.c.h.b16 %v1638
        %v1735 = vpack.c.b16 %v1672, %v1671
        %v1736 = vpack.c.b16 %v1674, %v1673
        %v1737 = vpack.c.b16 %v1676, %v1675
        %v1738 = vpack.c.b16 %v1678, %v1677
        %v1739 = vpack.c.b16 %v1680, %v1679
        %v1740 = vpack.c.b16 %v1682, %v1681
        %v1741 = vpack.c.b16 %v1684, %v1683
        %v1742 = vpack.c.b16 %v1686, %v1685
        %v1743 = vpack.c.b16 %v1688, %v1687
        %v1744 = vpack.c.b16 %v1690, %v1689
        %v1745 = vpack.c.b16 %v1692, %v1691
        %v1746 = vpack.c.b16 %v1694, %v1693
        %v1747 = vpack.c.b16 %v1696, %v1695
        %v1748 = vpack.c.b16 %v1698, %v1697
        %v1749 = vpack.c.b16 %v1700, %v1699
        %v1750 = vpack.c.b16 %v1702, %v1701
        %v1751 = vpack.c.b16 %v1704, %v1703
        %v1752 = vpack.c.b16 %v1706, %v1705
        %v1753 = vpack.c.b16 %v1708, %v1707
        %v1754 = vpack.c.b16 %v1710, %v1709
        %v1755 = vpack.c.b16 %v1712, %v1711
        %v1756 = vpack.c.b16 %v1714, %v1713
        %v1757 = vpack.c.b16 %v1716, %v1715
        %v1758 = vpack.c.b16 %v1718, %v1717
        %v1759 = vpack.c.b16 %v1720, %v1719
        %v1760 = vpack.c.b16 %v1722, %v1721
        %v1761 = vpack.c.b16 %v1724, %v1723
        %v1762 = vpack.c.b16 %v1726, %v1725
        %v1763 = vpack.c.b16 %v1728, %v1727
        %v1764 = vpack.c.b16 %v1730, %v1729
        %v1765 = vpack.c.b16 %v1732, %v1731
        %v1766 = vpack.c.b16 %v1734, %v1733
        %1799 = vst [vmem:[%s132] sm:$0xff] %v1735
        %1800 = vst [vmem:[%s132 + $0x8] sm:$0xff] %v1736
        %1801 = vst [vmem:[%s132 + $0x10] sm:$0xff] %v1737
        %1802 = vst [vmem:[%s132 + $0x18] sm:$0xff] %v1738
        %1803 = vst [vmem:[%s132 + $0x20] sm:$0xff] %v1739
        %1804 = vst [vmem:[%s132 + $0x28] sm:$0xff] %v1740
        %1805 = vst [vmem:[%s132 + $0x30] sm:$0xff] %v1741
        %1806 = vst [vmem:[%s132 + $0x38] sm:$0xff] %v1742
        %1807 = vst [vmem:[%s132 + $0x40] sm:$0xff] %v1743
        %1808 = vst [vmem:[%s132 + $0x48] sm:$0xff] %v1744
        %1809 = vst [vmem:[%s132 + $0x50] sm:$0xff] %v1745
        %1810 = vst [vmem:[%s132 + $0x58] sm:$0xff] %v1746
        %1811 = vst [vmem:[%s132 + $0x60] sm:$0xff] %v1747
        %1812 = vst [vmem:[%s132 + $0x68] sm:$0xff] %v1748
        %1813 = vst [vmem:[%s132 + $0x70] sm:$0xff] %v1749
        %1814 = vst [vmem:[%s132 + $0x78] sm:$0xff] %v1750
        %1815 = vst [vmem:[%s132 + $0x80] sm:$0xff] %v1751
        %1816 = vst [vmem:[%s132 + $0x88] sm:$0xff] %v1752
        %1817 = vst [vmem:[%s132 + $0x90] sm:$0xff] %v1753
        %1818 = vst [vmem:[%s132 + $0x98] sm:$0xff] %v1754
        %1819 = vst [vmem:[%s132 + $0xa0] sm:$0xff] %v1755
        %1820 = vst [vmem:[%s132 + $0xa8] sm:$0xff] %v1756
        %1821 = vst [vmem:[%s132 + $0xb0] sm:$0xff] %v1757
        %1822 = vst [vmem:[%s132 + $0xb8] sm:$0xff] %v1758
        %1823 = vst [vmem:[%s132 + $0xc0] sm:$0xff] %v1759
        %1824 = vst [vmem:[%s132 + $0xc8] sm:$0xff] %v1760
        %1825 = vst [vmem:[%s132 + $0xd0] sm:$0xff] %v1761
        %1826 = vst [vmem:[%s132 + $0xd8] sm:$0xff] %v1762
        %1827 = vst [vmem:[%s132 + $0xe0] sm:$0xff] %v1763
        %1828 = vst [vmem:[%s132 + $0xe8] sm:$0xff] %v1764
        %1829 = vst [vmem:[%s132 + $0xf0] sm:$0xff] %v1765
        %1830 = vst [vmem:[%s132 + $0xf8] sm:$0xff] %v1766
        %s1831 = sand.u32 %s68, 1
        %s1832 = sand.u32 %s68, 1
        %s1833 = smul.addr %s1832, 256
        %s1834 = scalar_lea.vmem [#allocation2], %s1833
        // Predicated region
        $region29: #{rotate_forward.1} parent=27 // pred_check
          %p1835 = pneg %p78
        $region30: #{rotate_forward.1} parent=27 // pred_check_branch
          %1837 = sbr.rel (%p1835) target = $region32
        $region31: #{rotate_forward.1} parent=27 // pred_region
          %s1838 = smul.u32 32, %s13
          %s1839 = smul.addr %s1838, 4
          %s1840 = scalar_lea.vmem %s2, %s1839
          // Predicated region
          $region33: #{rotate_forward.1} parent=31 // pred_check
            _
          $region34: #{rotate_forward.1} parent=31 // pred_check_branch
            %1842 = sbr.rel (0) target = $region36
          $region35: #{rotate_forward.1} parent=31 // pred_region
            // Predicated region
            $region37: #{rotate_forward.1} parent=35 // pred_check
              _
            $region38: #{rotate_forward.1} parent=35 // pred_check_branch
              %1844 = sbr.rel (0) target = $region40
            $region39: #{rotate_forward.1} parent=35 // pred_region
              loop: start=0, step=1, limit=1
              $region41: #{rotate_forward.1} parent=39 // loop_pre_header
                _
              $region42: #{rotate_forward.1} parent=39 // loop_header
                %s1846 = sphi 0, %s1850
                %p1847 = scmp.ge.s32.totalorder %s1846, 1
                %s1851 = sphi %s1834, %s1834
                %s1852 = sphi %s1840, %s1840
              $region43: #{rotate_forward.1} parent=39 // loop_header_branch
                %1849 = sbr.rel (%p1847) target = $region47
              $region44: #{rotate_forward.1} parent=39 // loop_body
                %v1853 = vld [vmem:[%s1851] sm:$0xff]
                %1854 = vst [vmem:[%s1852] sm:$0xff] %v1853
                %v1855 = vld [vmem:[%s1851 + $0x8] sm:$0xff]
                %1856 = vst [vmem:[%s1852 + $0x8] sm:$0xff] %v1855
                %v1857 = vld [vmem:[%s1851 + $0x10] sm:$0xff]
                %1858 = vst [vmem:[%s1852 + $0x10] sm:$0xff] %v1857
                %v1859 = vld [vmem:[%s1851 + $0x18] sm:$0xff]
                %1860 = vst [vmem:[%s1852 + $0x18] sm:$0xff] %v1859
                %v1861 = vld [vmem:[%s1851 + $0x20] sm:$0xff]
                %1862 = vst [vmem:[%s1852 + $0x20] sm:$0xff] %v1861
                %v1863 = vld [vmem:[%s1851 + $0x28] sm:$0xff]
                %1864 = vst [vmem:[%s1852 + $0x28] sm:$0xff] %v1863
                %v1865 = vld [vmem:[%s1851 + $0x30] sm:$0xff]
                %1866 = vst [vmem:[%s1852 + $0x30] sm:$0xff] %v1865
                %v1867 = vld [vmem:[%s1851 + $0x38] sm:$0xff]
                %1868 = vst [vmem:[%s1852 + $0x38] sm:$0xff] %v1867
                %v1869 = vld [vmem:[%s1851 + $0x40] sm:$0xff]
                %1870 = vst [vmem:[%s1852 + $0x40] sm:$0xff] %v1869
                %v1871 = vld [vmem:[%s1851 + $0x48] sm:$0xff]
                %1872 = vst [vmem:[%s1852 + $0x48] sm:$0xff] %v1871
                %v1873 = vld [vmem:[%s1851 + $0x50] sm:$0xff]
                %1874 = vst [vmem:[%s1852 + $0x50] sm:$0xff] %v1873
                %v1875 = vld [vmem:[%s1851 + $0x58] sm:$0xff]
                %1876 = vst [vmem:[%s1852 + $0x58] sm:$0xff] %v1875
                %v1877 = vld [vmem:[%s1851 + $0x60] sm:$0xff]
                %1878 = vst [vmem:[%s1852 + $0x60] sm:$0xff] %v1877
                %v1879 = vld [vmem:[%s1851 + $0x68] sm:$0xff]
                %1880 = vst [vmem:[%s1852 + $0x68] sm:$0xff] %v1879
                %v1881 = vld [vmem:[%s1851 + $0x70] sm:$0xff]
                %1882 = vst [vmem:[%s1852 + $0x70] sm:$0xff] %v1881
                %v1883 = vld [vmem:[%s1851 + $0x78] sm:$0xff]
                %1884 = vst [vmem:[%s1852 + $0x78] sm:$0xff] %v1883
                %v1885 = vld [vmem:[%s1851 + $0x80] sm:$0xff]
                %1886 = vst [vmem:[%s1852 + $0x280] sm:$0xff] %v1885
                %v1887 = vld [vmem:[%s1851 + $0x88] sm:$0xff]
                %1888 = vst [vmem:[%s1852 + $0x288] sm:$0xff] %v1887
                %v1889 = vld [vmem:[%s1851 + $0x90] sm:$0xff]
                %1890 = vst [vmem:[%s1852 + $0x290] sm:$0xff] %v1889
                %v1891 = vld [vmem:[%s1851 + $0x98] sm:$0xff]
                %1892 = vst [vmem:[%s1852 + $0x298] sm:$0xff] %v1891
                %v1893 = vld [vmem:[%s1851 + $0xa0] sm:$0xff]
                %1894 = vst [vmem:[%s1852 + $0x2a0] sm:$0xff] %v1893
                %v1895 = vld [vmem:[%s1851 + $0xa8] sm:$0xff]
                %1896 = vst [vmem:[%s1852 + $0x2a8] sm:$0xff] %v1895
                %v1897 = vld [vmem:[%s1851 + $0xb0] sm:$0xff]
                %1898 = vst [vmem:[%s1852 + $0x2b0] sm:$0xff] %v1897
                %v1899 = vld [vmem:[%s1851 + $0xb8] sm:$0xff]
                %1900 = vst [vmem:[%s1852 + $0x2b8] sm:$0xff] %v1899
                %v1901 = vld [vmem:[%s1851 + $0xc0] sm:$0xff]
                %1902 = vst [vmem:[%s1852 + $0x2c0] sm:$0xff] %v1901
                %v1903 = vld [vmem:[%s1851 + $0xc8] sm:$0xff]
                %1904 = vst [vmem:[%s1852 + $0x2c8] sm:$0xff] %v1903
                %v1905 = vld [vmem:[%s1851 + $0xd0] sm:$0xff]
                %1906 = vst [vmem:[%s1852 + $0x2d0] sm:$0xff] %v1905
                %v1907 = vld [vmem:[%s1851 + $0xd8] sm:$0xff]
                %1908 = vst [vmem:[%s1852 + $0x2d8] sm:$0xff] %v1907
                %v1909 = vld [vmem:[%s1851 + $0xe0] sm:$0xff]
                %1910 = vst [vmem:[%s1852 + $0x2e0] sm:$0xff] %v1909
                %v1911 = vld [vmem:[%s1851 + $0xe8] sm:$0xff]
                %1912 = vst [vmem:[%s1852 + $0x2e8] sm:$0xff] %v1911
                %v1913 = vld [vmem:[%s1851 + $0xf0] sm:$0xff]
                %1914 = vst [vmem:[%s1852 + $0x2f0] sm:$0xff] %v1913
                %v1915 = vld [vmem:[%s1851 + $0xf8] sm:$0xff]
                %1916 = vst [vmem:[%s1852 + $0x2f8] sm:$0xff] %v1915
              $region45: #{rotate_forward.1} parent=39 // loop_footer
                %s1850 = sadd.s32 1, %s1846
              $region46: #{rotate_forward.1} parent=39 // loop_footer_branch
                %1845 = sbr.rel target = $region42
              $region47: #{rotate_forward.1} parent=39 // loop_exit
                _
            $region40: #{rotate_forward.1} parent=35 // pred_fallthru
              _
            // Predicated region
            $region48: #{rotate_forward.1} parent=35 // pred_check
              _
            $region49: #{rotate_forward.1} parent=35 // pred_check_branch
              %1918 = sbr.rel target = $region51
            $region50: #{rotate_forward.1} parent=35 // pred_region
              _
            $region51: #{rotate_forward.1} parent=35 // pred_fallthru
              _
          $region36: #{rotate_forward.1} parent=31 // pred_fallthru
            _
          %1919 = vnop
        $region32: #{rotate_forward.1} parent=27 // pred_fallthru
          _
      $region28: #{rotate_forward.1} parent=5 // pred_fallthru
        _
      %p1920 = scmp.le.s32.totalorder 2, %s8
      // Predicated region
      $region52: #{rotate_forward.1} parent=5 // pred_check
        %p1921 = pneg %p1920
      $region53: #{rotate_forward.1} parent=5 // pred_check_branch
        %1923 = sbr.rel (%p1921) target = $region55
      $region54: #{rotate_forward.1} parent=5 // pred_region
        %s1924 = ssub.s32 %s8, 2
        // Predicated region
        $region56: #{rotate_forward.1} parent=54 // pred_check
          %p1925 = pneg %p84
        $region57: #{rotate_forward.1} parent=54 // pred_check_branch
          %1927 = sbr.rel (%p1925) target = $region59
        $region58: #{rotate_forward.1} parent=54 // pred_region
          %s1928 = sand.u32 %s69, 1
          %s1929 = sand.u32 %s69, 1
          %s1930 = smul.addr %s1929, 256
          %s1931 = scalar_lea.vmem [#allocation2], %s1930
        $region59: #{rotate_forward.1} parent=54 // pred_fallthru
          _
      $region55: #{rotate_forward.1} parent=5 // pred_fallthru
        _
    $region6: #{rotate_forward.1} parent=1 // loop_footer
      %s12 = sadd.s32 1, %s8
    $region7: #{rotate_forward.1} parent=1 // loop_footer_branch
      %7 = sbr.rel target = $region3
    $region8: #{rotate_forward.1} parent=1 // loop_exit
      _

</llo_original>
